<compile_context>
chip_gen: v5e
topology: v5e:2x2
jax: 0.10.0
libtpu: 0.0.40
codegen_flags: <defaults>
</compile_context>

<pallas_src>
import numpy as np
import jax
import jax.numpy as jnp
from jax.experimental import pallas as pl
from jax.experimental.pallas import tpu as pltpu

_OUT_PAD = 128  # lane-friendly padded width for the fc head output


# ----------------------------------------------------------------------------
# Kernel
# ----------------------------------------------------------------------------
def gru_regressor_kernel(x_ref,                      # (T*B, D)  time-major, flattened
                         wih0_ref, whh0_ref,         # (D, 3H), (H, 3H)
                         bi0_ref, bhn0_ref,          # (1, 3H) [b_ir+b_hr | b_iz+b_hz | b_in], (1, H) b_hn
                         wih1_ref, whh1_ref,         # (H, 3H), (H, 3H)
                         bi1_ref, bhn1_ref,          # (1, 3H), (1, H)
                         wfc_ref, bfc_ref,           # (H, OUT_PAD), (1, OUT_PAD)
                         out_ref):                   # (B, OUT_PAD)
    B = out_ref.shape[0]
    T = x_ref.shape[0] // B
    H = whh0_ref.shape[0]
    H2 = 2 * H

    wih0 = wih0_ref[...]
    whh0 = whh0_ref[...]
    bi0 = bi0_ref[...]
    bhn0 = bhn0_ref[...]
    wih1 = wih1_ref[...]
    whh1 = whh1_ref[...]
    bi1 = bi1_ref[...]
    bhn1 = bhn1_ref[...]

    # Hoisted layer-0 input projection: one big matmul instead of T tiny ones.
    gi0_all = (jnp.dot(x_ref[...], wih0, preferred_element_type=jnp.float32)
               + bi0)                                            # (T*B, 3H)

    def cell(gi, h_prev, whh, bhn):
        """Fused GRU cell. gi already contains the input projection + biases."""
        gh = jnp.dot(h_prev, whh, preferred_element_type=jnp.float32)  # (B, 3H)
        # One sigmoid for the fused [r | z] block.
        rz = jax.nn.sigmoid(gi[:, :H2] + gh[:, :H2])
        r = rz[:, :H]
        z = rz[:, H:H2]
        n = jnp.tanh(gi[:, H2:] + r * (gh[:, H2:] + bhn))
        return (1.0 - z) * n + z * h_prev

    h1 = jnp.zeros((B, H), jnp.float32)   # layer-0 hidden (h0 = 0, PyTorch default)
    h2 = jnp.zeros((B, H), jnp.float32)   # layer-1 hidden

    # T is small and static -> unroll (sublane-aligned static slices into gi0_all).
    for t in range(T):
        gi0_t = gi0_all[t * B:(t + 1) * B, :]
        h1 = cell(gi0_t, h1, whh0, bhn0)
        gi1 = jnp.dot(h1, wih1, preferred_element_type=jnp.float32) + bi1
        h2 = cell(gi1, h2, whh1, bhn1)

    # fc head on the last hidden state; single lane-dense (B, OUT_PAD) store.
    out_ref[...] = (jnp.dot(h2, wfc_ref[...], preferred_element_type=jnp.float32)
                    + bfc_ref[...])


# ----------------------------------------------------------------------------
# Wrapper
# ----------------------------------------------------------------------------
def gru_regressor(x, packed):
    """x: (B, T, D) batch-first, as in the PyTorch module. Returns (B, out_dim)."""
    B, T, D = x.shape
    out_dim = packed["out_dim"]
    out_pad = packed["wfc"].shape[1]

    # Pad batch to a multiple of 8 (f32 sublanes), go time-major and flatten to
    # (T*B_pad, D) so the kernel's hoisted layer-0 matmul is one contiguous GEMM.
    B_pad = ((B + 7) // 8) * 8
    x_tm = jnp.transpose(x.astype(jnp.float32), (1, 0, 2))      # (T, B, D)
    if B_pad != B:
        x_tm = jnp.pad(x_tm, ((0, 0), (0, B_pad - B), (0, 0)))
    x_flat = x_tm.reshape(T * B_pad, D)

    vmem = pl.BlockSpec(memory_space=pltpu.MemorySpace.VMEM)
    args = (x_flat,
            packed["wih0"], packed["whh0"], packed["bi0"], packed["bhn0"],
            packed["wih1"], packed["whh1"], packed["bi1"], packed["bhn1"],
            packed["wfc"], packed["bfc"])

    out = pl.pallas_call(
        gru_regressor_kernel,
        out_shape=jax.ShapeDtypeStruct((B_pad, out_pad), jnp.float32),
        in_specs=[vmem] * len(args),
        out_specs=vmem,
    )(*args)
    return out[:B, :out_dim]


# ----------------------------------------------------------------------------
# Parameter creation (PyTorch layout) + packing into the fused kernel layout
# ----------------------------------------------------------------------------
def init_raw_params(key, input_dim, hidden_dim, output_dim):
    """PyTorch-layout params with PyTorch's default U(-1/sqrt(H), 1/sqrt(H)) init."""
    k = 1.0 / np.sqrt(hidden_dim)
    keys = jax.random.split(key, 10)

    def u(kk, shape):
        return jax.random.uniform(kk, shape, jnp.float32, -k, k)

    return dict(
        w_ih_l0=u(keys[0], (3 * hidden_dim, input_dim)),
        w_hh_l0=u(keys[1], (3 * hidden_dim, hidden_dim)),
        b_ih_l0=u(keys[2], (3 * hidden_dim,)),
        b_hh_l0=u(keys[3], (3 * hidden_dim,)),
        w_ih_l1=u(keys[4], (3 * hidden_dim, hidden_dim)),
        w_hh_l1=u(keys[5], (3 * hidden_dim, hidden_dim)),
        b_ih_l1=u(keys[6], (3 * hidden_dim,)),
        b_hh_l1=u(keys[7], (3 * hidden_dim,)),
        w_fc=u(keys[8], (output_dim, hidden_dim)),
        b_fc=u(keys[9], (output_dim,)),
    )


def pack_params(raw, out_pad=_OUT_PAD):
    """Repack PyTorch-layout weights into the fused kernel layout."""
    H = raw["w_hh_l0"].shape[1]
    out_dim = raw["w_fc"].shape[0]

    def fuse_w(w):
        # (3H, D_in) rows [W_r; W_z; W_n] -> (D_in, 3H) cols [r | z | n]
        return jnp.transpose(w)

    def fuse_bi(b_ih, b_hh):
        # r/z gates: input+hidden biases always summed -> pre-add.  n gate: keep b_in here.
        return jnp.concatenate([b_ih[:2 * H] + b_hh[:2 * H], b_ih[2 * H:]]).reshape(1, 3 * H)

    def bhn(b_hh):
        # n-gate hidden bias must stay inside r * (W_hn h + b_hn).
        return b_hh[2 * H:].reshape(1, H)

    wfc = jnp.transpose(raw["w_fc"])                          # (H, out_dim)
    wfc = jnp.pad(wfc, ((0, 0), (0, out_pad - out_dim)))      # (H, out_pad)
    bfc = jnp.pad(raw["b_fc"], (0, out_pad - out_dim)).reshape(1, out_pad)

    return dict(
        wih0=fuse_w(raw["w_ih_l0"]), whh0=fuse_w(raw["w_hh_l0"]),
        bi0=fuse_bi(raw["b_ih_l0"], raw["b_hh_l0"]), bhn0=bhn(raw["b_hh_l0"]),
        wih1=fuse_w(raw["w_ih_l1"]), whh1=fuse_w(raw["w_hh_l1"]),
        bi1=fuse_bi(raw["b_ih_l1"], raw["b_hh_l1"]), bhn1=bhn(raw["b_hh_l1"]),
        wfc=wfc, bfc=bfc, out_dim=out_dim,
    )


# ----------------------------------------------------------------------------
# Pure-JAX reference (written directly from the PyTorch-layout weights)
# ----------------------------------------------------------------------------
def reference(x, raw):
    B, T, _ = x.shape
    H = raw["w_hh_l0"].shape[1]

    def cell(x_t, h, w_ih, w_hh, b_ih, b_hh):
        gi = x_t @ w_ih.T + b_ih
        gh = h @ w_hh.T + b_hh
        i_r, i_z, i_n = jnp.split(gi, 3, axis=1)
        h_r, h_z, h_n = jnp.split(gh, 3, axis=1)
        r = jax.nn.sigmoid(i_r + h_r)
        z = jax.nn.sigmoid(i_z + h_z)
        n = jnp.tanh(i_n + r * h_n)
        return (1.0 - z) * n + z * h

    h1 = jnp.zeros((B, H), jnp.float32)
    h2 = jnp.zeros((B, H), jnp.float32)
    for t in range(T):
        h1 = cell(x[:, t, :], h1, raw["w_ih_l0"], raw["w_hh_l0"],
                  raw["b_ih_l0"], raw["b_hh_l0"])
        h2 = cell(h1, h2, raw["w_ih_l1"], raw["w_hh_l1"],
                  raw["b_ih_l1"], raw["b_hh_l1"])
    return h2 @ raw["w_fc"].T + raw["b_fc"]


if __name__ == "__main__":
    B, T, D, H, OUT = 4, 8, 16, 32, 1   # small shapes consistent with the module
    key = jax.random.PRNGKey(0)
    kx, kp = jax.random.split(key)

    x = jax.random.normal(kx, (B, T, D), jnp.float32)
    raw = init_raw_params(kp, D, H, OUT)
    packed = pack_params(raw)

    out = jax.block_until_ready(gru_regressor(x, packed))
    ref = jax.block_until_ready(reference(x, raw))

    assert out.shape == (B, OUT)
    np.testing.assert_allclose(np.asarray(out), np.asarray(ref), rtol=1e-4, atol=1e-4)
    print("KERNEL_OK")
</pallas_src>

<mosaic_0001>
module attributes {stable_mosaic.version = 11 : i64} {
  func.func @gru_regressor_kernel(%arg0: memref<64x16xf32, #tpu.memory_space<vmem>>, %arg1: memref<16x96xf32, #tpu.memory_space<vmem>>, %arg2: memref<32x96xf32, #tpu.memory_space<vmem>>, %arg3: memref<1x96xf32, #tpu.memory_space<vmem>>, %arg4: memref<1x32xf32, #tpu.memory_space<vmem>>, %arg5: memref<32x96xf32, #tpu.memory_space<vmem>>, %arg6: memref<32x96xf32, #tpu.memory_space<vmem>>, %arg7: memref<1x96xf32, #tpu.memory_space<vmem>>, %arg8: memref<1x32xf32, #tpu.memory_space<vmem>>, %arg9: memref<32x128xf32, #tpu.memory_space<vmem>>, %arg10: memref<1x128xf32, #tpu.memory_space<vmem>>, %arg11: memref<8x128xf32, #tpu.memory_space<vmem>>) attributes {dimension_semantics = [], scalar_prefetch = 0 : i64, scratch_operands = 0 : i64, tpu.core_type = #tpu.core_type<tc>} {
    %c0 = arith.constant 0 : index
    %c0_0 = arith.constant 0 : index
    %0 = vector.load %arg1[%c0, %c0_0] : memref<16x96xf32, #tpu.memory_space<vmem>>, vector<16x96xf32>
    %c0_1 = arith.constant 0 : index
    %c0_2 = arith.constant 0 : index
    %1 = vector.load %arg2[%c0_1, %c0_2] : memref<32x96xf32, #tpu.memory_space<vmem>>, vector<32x96xf32>
    %c0_3 = arith.constant 0 : index
    %c0_4 = arith.constant 0 : index
    %2 = vector.load %arg3[%c0_3, %c0_4] : memref<1x96xf32, #tpu.memory_space<vmem>>, vector<1x96xf32>
    %c0_5 = arith.constant 0 : index
    %c0_6 = arith.constant 0 : index
    %3 = vector.load %arg4[%c0_5, %c0_6] : memref<1x32xf32, #tpu.memory_space<vmem>>, vector<1x32xf32>
    %c0_7 = arith.constant 0 : index
    %c0_8 = arith.constant 0 : index
    %4 = vector.load %arg5[%c0_7, %c0_8] : memref<32x96xf32, #tpu.memory_space<vmem>>, vector<32x96xf32>
    %c0_9 = arith.constant 0 : index
    %c0_10 = arith.constant 0 : index
    %5 = vector.load %arg6[%c0_9, %c0_10] : memref<32x96xf32, #tpu.memory_space<vmem>>, vector<32x96xf32>
    %c0_11 = arith.constant 0 : index
    %c0_12 = arith.constant 0 : index
    %6 = vector.load %arg7[%c0_11, %c0_12] : memref<1x96xf32, #tpu.memory_space<vmem>>, vector<1x96xf32>
    %c0_13 = arith.constant 0 : index
    %c0_14 = arith.constant 0 : index
    %7 = vector.load %arg8[%c0_13, %c0_14] : memref<1x32xf32, #tpu.memory_space<vmem>>, vector<1x32xf32>
    %c0_15 = arith.constant 0 : index
    %c0_16 = arith.constant 0 : index
    %8 = vector.load %arg0[%c0_15, %c0_16] : memref<64x16xf32, #tpu.memory_space<vmem>>, vector<64x16xf32>
    %cst = arith.constant dense<0.000000e+00> : vector<64x96xf32>
    %9 = tpu.matmul %8, %0, %cst {dimension_numbers = #tpu.dot_dimension_numbers<[1], [0], [0], [1], [0, 0, 1, 1], [], []>} : vector<64x16xf32>, vector<16x96xf32>, vector<64x96xf32> -> vector<64x96xf32>
    %10 = vector.broadcast %2 : vector<1x96xf32> to vector<64x96xf32>
    %11 = arith.addf %9, %10 : vector<64x96xf32>
    %cst_17 = arith.constant 0.000000e+00 : f32
    %12 = vector.broadcast %cst_17 : f32 to vector<8x32xf32>
    %cst_18 = arith.constant 0.000000e+00 : f32
    %13 = vector.broadcast %cst_18 : f32 to vector<8x32xf32>
    %14 = vector.extract_strided_slice %11 {offsets = [0, 0], sizes = [8, 96], strides = [1, 1]} : vector<64x96xf32> to vector<8x96xf32>
    %cst_19 = arith.constant dense<0.000000e+00> : vector<8x96xf32>
    %15 = tpu.matmul %12, %1, %cst_19 {dimension_numbers = #tpu.dot_dimension_numbers<[1], [0], [0], [1], [0, 0, 1, 1], [], []>} : vector<8x32xf32>, vector<32x96xf32>, vector<8x96xf32> -> vector<8x96xf32>
    %16 = vector.extract_strided_slice %14 {offsets = [0, 0], sizes = [8, 64], strides = [1, 1]} : vector<8x96xf32> to vector<8x64xf32>
    %17 = vector.extract_strided_slice %15 {offsets = [0, 0], sizes = [8, 64], strides = [1, 1]} : vector<8x96xf32> to vector<8x64xf32>
    %18 = arith.addf %16, %17 : vector<8x64xf32>
    %19 = arith.negf %18 : vector<8x64xf32>
    %20 = math.exp %19 : vector<8x64xf32>
    %cst_20 = arith.constant 1.000000e+00 : f32
    %21 = vector.broadcast %cst_20 : f32 to vector<8x64xf32>
    %22 = arith.addf %21, %20 : vector<8x64xf32>
    %23 = arith.divf %21, %22 : vector<8x64xf32>
    %24 = vector.extract_strided_slice %23 {offsets = [0, 0], sizes = [8, 32], strides = [1, 1]} : vector<8x64xf32> to vector<8x32xf32>
    %25 = vector.extract_strided_slice %23 {offsets = [0, 32], sizes = [8, 32], strides = [1, 1]} : vector<8x64xf32> to vector<8x32xf32>
    %26 = vector.extract_strided_slice %14 {offsets = [0, 64], sizes = [8, 32], strides = [1, 1]} : vector<8x96xf32> to vector<8x32xf32>
    %27 = vector.extract_strided_slice %15 {offsets = [0, 64], sizes = [8, 32], strides = [1, 1]} : vector<8x96xf32> to vector<8x32xf32>
    %28 = vector.broadcast %3 : vector<1x32xf32> to vector<8x32xf32>
    %29 = arith.addf %27, %28 : vector<8x32xf32>
    %30 = arith.mulf %24, %29 : vector<8x32xf32>
    %31 = arith.addf %26, %30 : vector<8x32xf32>
    %32 = math.tanh %31 : vector<8x32xf32>
    %cst_21 = arith.constant 1.000000e+00 : f32
    %33 = vector.broadcast %cst_21 : f32 to vector<8x32xf32>
    %34 = arith.subf %33, %25 : vector<8x32xf32>
    %35 = arith.mulf %34, %32 : vector<8x32xf32>
    %36 = arith.mulf %25, %12 : vector<8x32xf32>
    %37 = arith.addf %35, %36 : vector<8x32xf32>
    %cst_22 = arith.constant dense<0.000000e+00> : vector<8x96xf32>
    %38 = tpu.matmul %37, %4, %cst_22 {dimension_numbers = #tpu.dot_dimension_numbers<[1], [0], [0], [1], [0, 0, 1, 1], [], []>} : vector<8x32xf32>, vector<32x96xf32>, vector<8x96xf32> -> vector<8x96xf32>
    %39 = vector.broadcast %6 : vector<1x96xf32> to vector<8x96xf32>
    %40 = arith.addf %38, %39 : vector<8x96xf32>
    %cst_23 = arith.constant dense<0.000000e+00> : vector<8x96xf32>
    %41 = tpu.matmul %13, %5, %cst_23 {dimension_numbers = #tpu.dot_dimension_numbers<[1], [0], [0], [1], [0, 0, 1, 1], [], []>} : vector<8x32xf32>, vector<32x96xf32>, vector<8x96xf32> -> vector<8x96xf32>
    %42 = vector.extract_strided_slice %40 {offsets = [0, 0], sizes = [8, 64], strides = [1, 1]} : vector<8x96xf32> to vector<8x64xf32>
    %43 = vector.extract_strided_slice %41 {offsets = [0, 0], sizes = [8, 64], strides = [1, 1]} : vector<8x96xf32> to vector<8x64xf32>
    %44 = arith.addf %42, %43 : vector<8x64xf32>
    %45 = arith.negf %44 : vector<8x64xf32>
    %46 = math.exp %45 : vector<8x64xf32>
    %cst_24 = arith.constant 1.000000e+00 : f32
    %47 = vector.broadcast %cst_24 : f32 to vector<8x64xf32>
    %48 = arith.addf %47, %46 : vector<8x64xf32>
    %49 = arith.divf %47, %48 : vector<8x64xf32>
    %50 = vector.extract_strided_slice %49 {offsets = [0, 0], sizes = [8, 32], strides = [1, 1]} : vector<8x64xf32> to vector<8x32xf32>
    %51 = vector.extract_strided_slice %49 {offsets = [0, 32], sizes = [8, 32], strides = [1, 1]} : vector<8x64xf32> to vector<8x32xf32>
    %52 = vector.extract_strided_slice %40 {offsets = [0, 64], sizes = [8, 32], strides = [1, 1]} : vector<8x96xf32> to vector<8x32xf32>
    %53 = vector.extract_strided_slice %41 {offsets = [0, 64], sizes = [8, 32], strides = [1, 1]} : vector<8x96xf32> to vector<8x32xf32>
    %54 = vector.broadcast %7 : vector<1x32xf32> to vector<8x32xf32>
    %55 = arith.addf %53, %54 : vector<8x32xf32>
    %56 = arith.mulf %50, %55 : vector<8x32xf32>
    %57 = arith.addf %52, %56 : vector<8x32xf32>
    %58 = math.tanh %57 : vector<8x32xf32>
    %cst_25 = arith.constant 1.000000e+00 : f32
    %59 = vector.broadcast %cst_25 : f32 to vector<8x32xf32>
    %60 = arith.subf %59, %51 : vector<8x32xf32>
    %61 = arith.mulf %60, %58 : vector<8x32xf32>
    %62 = arith.mulf %51, %13 : vector<8x32xf32>
    %63 = arith.addf %61, %62 : vector<8x32xf32>
    %64 = vector.extract_strided_slice %11 {offsets = [8, 0], sizes = [8, 96], strides = [1, 1]} : vector<64x96xf32> to vector<8x96xf32>
    %cst_26 = arith.constant dense<0.000000e+00> : vector<8x96xf32>
    %65 = tpu.matmul %37, %1, %cst_26 {dimension_numbers = #tpu.dot_dimension_numbers<[1], [0], [0], [1], [0, 0, 1, 1], [], []>} : vector<8x32xf32>, vector<32x96xf32>, vector<8x96xf32> -> vector<8x96xf32>
    %66 = vector.extract_strided_slice %64 {offsets = [0, 0], sizes = [8, 64], strides = [1, 1]} : vector<8x96xf32> to vector<8x64xf32>
    %67 = vector.extract_strided_slice %65 {offsets = [0, 0], sizes = [8, 64], strides = [1, 1]} : vector<8x96xf32> to vector<8x64xf32>
    %68 = arith.addf %66, %67 : vector<8x64xf32>
    %69 = arith.negf %68 : vector<8x64xf32>
    %70 = math.exp %69 : vector<8x64xf32>
    %cst_27 = arith.constant 1.000000e+00 : f32
    %71 = vector.broadcast %cst_27 : f32 to vector<8x64xf32>
    %72 = arith.addf %71, %70 : vector<8x64xf32>
    %73 = arith.divf %71, %72 : vector<8x64xf32>
    %74 = vector.extract_strided_slice %73 {offsets = [0, 0], sizes = [8, 32], strides = [1, 1]} : vector<8x64xf32> to vector<8x32xf32>
    %75 = vector.extract_strided_slice %73 {offsets = [0, 32], sizes = [8, 32], strides = [1, 1]} : vector<8x64xf32> to vector<8x32xf32>
    %76 = vector.extract_strided_slice %64 {offsets = [0, 64], sizes = [8, 32], strides = [1, 1]} : vector<8x96xf32> to vector<8x32xf32>
    %77 = vector.extract_strided_slice %65 {offsets = [0, 64], sizes = [8, 32], strides = [1, 1]} : vector<8x96xf32> to vector<8x32xf32>
    %78 = vector.broadcast %3 : vector<1x32xf32> to vector<8x32xf32>
    %79 = arith.addf %77, %78 : vector<8x32xf32>
    %80 = arith.mulf %74, %79 : vector<8x32xf32>
    %81 = arith.addf %76, %80 : vector<8x32xf32>
    %82 = math.tanh %81 : vector<8x32xf32>
    %cst_28 = arith.constant 1.000000e+00 : f32
    %83 = vector.broadcast %cst_28 : f32 to vector<8x32xf32>
    %84 = arith.subf %83, %75 : vector<8x32xf32>
    %85 = arith.mulf %84, %82 : vector<8x32xf32>
    %86 = arith.mulf %75, %37 : vector<8x32xf32>
    %87 = arith.addf %85, %86 : vector<8x32xf32>
    %cst_29 = arith.constant dense<0.000000e+00> : vector<8x96xf32>
    %88 = tpu.matmul %87, %4, %cst_29 {dimension_numbers = #tpu.dot_dimension_numbers<[1], [0], [0], [1], [0, 0, 1, 1], [], []>} : vector<8x32xf32>, vector<32x96xf32>, vector<8x96xf32> -> vector<8x96xf32>
    %89 = vector.broadcast %6 : vector<1x96xf32> to vector<8x96xf32>
    %90 = arith.addf %88, %89 : vector<8x96xf32>
    %cst_30 = arith.constant dense<0.000000e+00> : vector<8x96xf32>
    %91 = tpu.matmul %63, %5, %cst_30 {dimension_numbers = #tpu.dot_dimension_numbers<[1], [0], [0], [1], [0, 0, 1, 1], [], []>} : vector<8x32xf32>, vector<32x96xf32>, vector<8x96xf32> -> vector<8x96xf32>
    %92 = vector.extract_strided_slice %90 {offsets = [0, 0], sizes = [8, 64], strides = [1, 1]} : vector<8x96xf32> to vector<8x64xf32>
    %93 = vector.extract_strided_slice %91 {offsets = [0, 0], sizes = [8, 64], strides = [1, 1]} : vector<8x96xf32> to vector<8x64xf32>
    %94 = arith.addf %92, %93 : vector<8x64xf32>
    %95 = arith.negf %94 : vector<8x64xf32>
    %96 = math.exp %95 : vector<8x64xf32>
    %cst_31 = arith.constant 1.000000e+00 : f32
    %97 = vector.broadcast %cst_31 : f32 to vector<8x64xf32>
    %98 = arith.addf %97, %96 : vector<8x64xf32>
    %99 = arith.divf %97, %98 : vector<8x64xf32>
    %100 = vector.extract_strided_slice %99 {offsets = [0, 0], sizes = [8, 32], strides = [1, 1]} : vector<8x64xf32> to vector<8x32xf32>
    %101 = vector.extract_strided_slice %99 {offsets = [0, 32], sizes = [8, 32], strides = [1, 1]} : vector<8x64xf32> to vector<8x32xf32>
    %102 = vector.extract_strided_slice %90 {offsets = [0, 64], sizes = [8, 32], strides = [1, 1]} : vector<8x96xf32> to vector<8x32xf32>
    %103 = vector.extract_strided_slice %91 {offsets = [0, 64], sizes = [8, 32], strides = [1, 1]} : vector<8x96xf32> to vector<8x32xf32>
    %104 = vector.broadcast %7 : vector<1x32xf32> to vector<8x32xf32>
    %105 = arith.addf %103, %104 : vector<8x32xf32>
    %106 = arith.mulf %100, %105 : vector<8x32xf32>
    %107 = arith.addf %102, %106 : vector<8x32xf32>
    %108 = math.tanh %107 : vector<8x32xf32>
    %cst_32 = arith.constant 1.000000e+00 : f32
    %109 = vector.broadcast %cst_32 : f32 to vector<8x32xf32>
    %110 = arith.subf %109, %101 : vector<8x32xf32>
    %111 = arith.mulf %110, %108 : vector<8x32xf32>
    %112 = arith.mulf %101, %63 : vector<8x32xf32>
    %113 = arith.addf %111, %112 : vector<8x32xf32>
    %114 = vector.extract_strided_slice %11 {offsets = [16, 0], sizes = [8, 96], strides = [1, 1]} : vector<64x96xf32> to vector<8x96xf32>
    %cst_33 = arith.constant dense<0.000000e+00> : vector<8x96xf32>
    %115 = tpu.matmul %87, %1, %cst_33 {dimension_numbers = #tpu.dot_dimension_numbers<[1], [0], [0], [1], [0, 0, 1, 1], [], []>} : vector<8x32xf32>, vector<32x96xf32>, vector<8x96xf32> -> vector<8x96xf32>
    %116 = vector.extract_strided_slice %114 {offsets = [0, 0], sizes = [8, 64], strides = [1, 1]} : vector<8x96xf32> to vector<8x64xf32>
    %117 = vector.extract_strided_slice %115 {offsets = [0, 0], sizes = [8, 64], strides = [1, 1]} : vector<8x96xf32> to vector<8x64xf32>
    %118 = arith.addf %116, %117 : vector<8x64xf32>
    %119 = arith.negf %118 : vector<8x64xf32>
    %120 = math.exp %119 : vector<8x64xf32>
    %cst_34 = arith.constant 1.000000e+00 : f32
    %121 = vector.broadcast %cst_34 : f32 to vector<8x64xf32>
    %122 = arith.addf %121, %120 : vector<8x64xf32>
    %123 = arith.divf %121, %122 : vector<8x64xf32>
    %124 = vector.extract_strided_slice %123 {offsets = [0, 0], sizes = [8, 32], strides = [1, 1]} : vector<8x64xf32> to vector<8x32xf32>
    %125 = vector.extract_strided_slice %123 {offsets = [0, 32], sizes = [8, 32], strides = [1, 1]} : vector<8x64xf32> to vector<8x32xf32>
    %126 = vector.extract_strided_slice %114 {offsets = [0, 64], sizes = [8, 32], strides = [1, 1]} : vector<8x96xf32> to vector<8x32xf32>
    %127 = vector.extract_strided_slice %115 {offsets = [0, 64], sizes = [8, 32], strides = [1, 1]} : vector<8x96xf32> to vector<8x32xf32>
    %128 = vector.broadcast %3 : vector<1x32xf32> to vector<8x32xf32>
    %129 = arith.addf %127, %128 : vector<8x32xf32>
    %130 = arith.mulf %124, %129 : vector<8x32xf32>
    %131 = arith.addf %126, %130 : vector<8x32xf32>
    %132 = math.tanh %131 : vector<8x32xf32>
    %cst_35 = arith.constant 1.000000e+00 : f32
    %133 = vector.broadcast %cst_35 : f32 to vector<8x32xf32>
    %134 = arith.subf %133, %125 : vector<8x32xf32>
    %135 = arith.mulf %134, %132 : vector<8x32xf32>
    %136 = arith.mulf %125, %87 : vector<8x32xf32>
    %137 = arith.addf %135, %136 : vector<8x32xf32>
    %cst_36 = arith.constant dense<0.000000e+00> : vector<8x96xf32>
    %138 = tpu.matmul %137, %4, %cst_36 {dimension_numbers = #tpu.dot_dimension_numbers<[1], [0], [0], [1], [0, 0, 1, 1], [], []>} : vector<8x32xf32>, vector<32x96xf32>, vector<8x96xf32> -> vector<8x96xf32>
    %139 = vector.broadcast %6 : vector<1x96xf32> to vector<8x96xf32>
    %140 = arith.addf %138, %139 : vector<8x96xf32>
    %cst_37 = arith.constant dense<0.000000e+00> : vector<8x96xf32>
    %141 = tpu.matmul %113, %5, %cst_37 {dimension_numbers = #tpu.dot_dimension_numbers<[1], [0], [0], [1], [0, 0, 1, 1], [], []>} : vector<8x32xf32>, vector<32x96xf32>, vector<8x96xf32> -> vector<8x96xf32>
    %142 = vector.extract_strided_slice %140 {offsets = [0, 0], sizes = [8, 64], strides = [1, 1]} : vector<8x96xf32> to vector<8x64xf32>
    %143 = vector.extract_strided_slice %141 {offsets = [0, 0], sizes = [8, 64], strides = [1, 1]} : vector<8x96xf32> to vector<8x64xf32>
    %144 = arith.addf %142, %143 : vector<8x64xf32>
    %145 = arith.negf %144 : vector<8x64xf32>
    %146 = math.exp %145 : vector<8x64xf32>
    %cst_38 = arith.constant 1.000000e+00 : f32
    %147 = vector.broadcast %cst_38 : f32 to vector<8x64xf32>
    %148 = arith.addf %147, %146 : vector<8x64xf32>
    %149 = arith.divf %147, %148 : vector<8x64xf32>
    %150 = vector.extract_strided_slice %149 {offsets = [0, 0], sizes = [8, 32], strides = [1, 1]} : vector<8x64xf32> to vector<8x32xf32>
    %151 = vector.extract_strided_slice %149 {offsets = [0, 32], sizes = [8, 32], strides = [1, 1]} : vector<8x64xf32> to vector<8x32xf32>
    %152 = vector.extract_strided_slice %140 {offsets = [0, 64], sizes = [8, 32], strides = [1, 1]} : vector<8x96xf32> to vector<8x32xf32>
    %153 = vector.extract_strided_slice %141 {offsets = [0, 64], sizes = [8, 32], strides = [1, 1]} : vector<8x96xf32> to vector<8x32xf32>
    %154 = vector.broadcast %7 : vector<1x32xf32> to vector<8x32xf32>
    %155 = arith.addf %153, %154 : vector<8x32xf32>
    %156 = arith.mulf %150, %155 : vector<8x32xf32>
    %157 = arith.addf %152, %156 : vector<8x32xf32>
    %158 = math.tanh %157 : vector<8x32xf32>
    %cst_39 = arith.constant 1.000000e+00 : f32
    %159 = vector.broadcast %cst_39 : f32 to vector<8x32xf32>
    %160 = arith.subf %159, %151 : vector<8x32xf32>
    %161 = arith.mulf %160, %158 : vector<8x32xf32>
    %162 = arith.mulf %151, %113 : vector<8x32xf32>
    %163 = arith.addf %161, %162 : vector<8x32xf32>
    %164 = vector.extract_strided_slice %11 {offsets = [24, 0], sizes = [8, 96], strides = [1, 1]} : vector<64x96xf32> to vector<8x96xf32>
    %cst_40 = arith.constant dense<0.000000e+00> : vector<8x96xf32>
    %165 = tpu.matmul %137, %1, %cst_40 {dimension_numbers = #tpu.dot_dimension_numbers<[1], [0], [0], [1], [0, 0, 1, 1], [], []>} : vector<8x32xf32>, vector<32x96xf32>, vector<8x96xf32> -> vector<8x96xf32>
    %166 = vector.extract_strided_slice %164 {offsets = [0, 0], sizes = [8, 64], strides = [1, 1]} : vector<8x96xf32> to vector<8x64xf32>
    %167 = vector.extract_strided_slice %165 {offsets = [0, 0], sizes = [8, 64], strides = [1, 1]} : vector<8x96xf32> to vector<8x64xf32>
    %168 = arith.addf %166, %167 : vector<8x64xf32>
    %169 = arith.negf %168 : vector<8x64xf32>
    %170 = math.exp %169 : vector<8x64xf32>
    %cst_41 = arith.constant 1.000000e+00 : f32
    %171 = vector.broadcast %cst_41 : f32 to vector<8x64xf32>
    %172 = arith.addf %171, %170 : vector<8x64xf32>
    %173 = arith.divf %171, %172 : vector<8x64xf32>
    %174 = vector.extract_strided_slice %173 {offsets = [0, 0], sizes = [8, 32], strides = [1, 1]} : vector<8x64xf32> to vector<8x32xf32>
    %175 = vector.extract_strided_slice %173 {offsets = [0, 32], sizes = [8, 32], strides = [1, 1]} : vector<8x64xf32> to vector<8x32xf32>
    %176 = vector.extract_strided_slice %164 {offsets = [0, 64], sizes = [8, 32], strides = [1, 1]} : vector<8x96xf32> to vector<8x32xf32>
    %177 = vector.extract_strided_slice %165 {offsets = [0, 64], sizes = [8, 32], strides = [1, 1]} : vector<8x96xf32> to vector<8x32xf32>
    %178 = vector.broadcast %3 : vector<1x32xf32> to vector<8x32xf32>
    %179 = arith.addf %177, %178 : vector<8x32xf32>
    %180 = arith.mulf %174, %179 : vector<8x32xf32>
    %181 = arith.addf %176, %180 : vector<8x32xf32>
    %182 = math.tanh %181 : vector<8x32xf32>
    %cst_42 = arith.constant 1.000000e+00 : f32
    %183 = vector.broadcast %cst_42 : f32 to vector<8x32xf32>
    %184 = arith.subf %183, %175 : vector<8x32xf32>
    %185 = arith.mulf %184, %182 : vector<8x32xf32>
    %186 = arith.mulf %175, %137 : vector<8x32xf32>
    %187 = arith.addf %185, %186 : vector<8x32xf32>
    %cst_43 = arith.constant dense<0.000000e+00> : vector<8x96xf32>
    %188 = tpu.matmul %187, %4, %cst_43 {dimension_numbers = #tpu.dot_dimension_numbers<[1], [0], [0], [1], [0, 0, 1, 1], [], []>} : vector<8x32xf32>, vector<32x96xf32>, vector<8x96xf32> -> vector<8x96xf32>
    %189 = vector.broadcast %6 : vector<1x96xf32> to vector<8x96xf32>
    %190 = arith.addf %188, %189 : vector<8x96xf32>
    %cst_44 = arith.constant dense<0.000000e+00> : vector<8x96xf32>
    %191 = tpu.matmul %163, %5, %cst_44 {dimension_numbers = #tpu.dot_dimension_numbers<[1], [0], [0], [1], [0, 0, 1, 1], [], []>} : vector<8x32xf32>, vector<32x96xf32>, vector<8x96xf32> -> vector<8x96xf32>
    %192 = vector.extract_strided_slice %190 {offsets = [0, 0], sizes = [8, 64], strides = [1, 1]} : vector<8x96xf32> to vector<8x64xf32>
    %193 = vector.extract_strided_slice %191 {offsets = [0, 0], sizes = [8, 64], strides = [1, 1]} : vector<8x96xf32> to vector<8x64xf32>
    %194 = arith.addf %192, %193 : vector<8x64xf32>
    %195 = arith.negf %194 : vector<8x64xf32>
    %196 = math.exp %195 : vector<8x64xf32>
    %cst_45 = arith.constant 1.000000e+00 : f32
    %197 = vector.broadcast %cst_45 : f32 to vector<8x64xf32>
    %198 = arith.addf %197, %196 : vector<8x64xf32>
    %199 = arith.divf %197, %198 : vector<8x64xf32>
    %200 = vector.extract_strided_slice %199 {offsets = [0, 0], sizes = [8, 32], strides = [1, 1]} : vector<8x64xf32> to vector<8x32xf32>
    %201 = vector.extract_strided_slice %199 {offsets = [0, 32], sizes = [8, 32], strides = [1, 1]} : vector<8x64xf32> to vector<8x32xf32>
    %202 = vector.extract_strided_slice %190 {offsets = [0, 64], sizes = [8, 32], strides = [1, 1]} : vector<8x96xf32> to vector<8x32xf32>
    %203 = vector.extract_strided_slice %191 {offsets = [0, 64], sizes = [8, 32], strides = [1, 1]} : vector<8x96xf32> to vector<8x32xf32>
    %204 = vector.broadcast %7 : vector<1x32xf32> to vector<8x32xf32>
    %205 = arith.addf %203, %204 : vector<8x32xf32>
    %206 = arith.mulf %200, %205 : vector<8x32xf32>
    %207 = arith.addf %202, %206 : vector<8x32xf32>
    %208 = math.tanh %207 : vector<8x32xf32>
    %cst_46 = arith.constant 1.000000e+00 : f32
    %209 = vector.broadcast %cst_46 : f32 to vector<8x32xf32>
    %210 = arith.subf %209, %201 : vector<8x32xf32>
    %211 = arith.mulf %210, %208 : vector<8x32xf32>
    %212 = arith.mulf %201, %163 : vector<8x32xf32>
    %213 = arith.addf %211, %212 : vector<8x32xf32>
    %214 = vector.extract_strided_slice %11 {offsets = [32, 0], sizes = [8, 96], strides = [1, 1]} : vector<64x96xf32> to vector<8x96xf32>
    %cst_47 = arith.constant dense<0.000000e+00> : vector<8x96xf32>
    %215 = tpu.matmul %187, %1, %cst_47 {dimension_numbers = #tpu.dot_dimension_numbers<[1], [0], [0], [1], [0, 0, 1, 1], [], []>} : vector<8x32xf32>, vector<32x96xf32>, vector<8x96xf32> -> vector<8x96xf32>
    %216 = vector.extract_strided_slice %214 {offsets = [0, 0], sizes = [8, 64], strides = [1, 1]} : vector<8x96xf32> to vector<8x64xf32>
    %217 = vector.extract_strided_slice %215 {offsets = [0, 0], sizes = [8, 64], strides = [1, 1]} : vector<8x96xf32> to vector<8x64xf32>
    %218 = arith.addf %216, %217 : vector<8x64xf32>
    %219 = arith.negf %218 : vector<8x64xf32>
    %220 = math.exp %219 : vector<8x64xf32>
    %cst_48 = arith.constant 1.000000e+00 : f32
    %221 = vector.broadcast %cst_48 : f32 to vector<8x64xf32>
    %222 = arith.addf %221, %220 : vector<8x64xf32>
    %223 = arith.divf %221, %222 : vector<8x64xf32>
    %224 = vector.extract_strided_slice %223 {offsets = [0, 0], sizes = [8, 32], strides = [1, 1]} : vector<8x64xf32> to vector<8x32xf32>
    %225 = vector.extract_strided_slice %223 {offsets = [0, 32], sizes = [8, 32], strides = [1, 1]} : vector<8x64xf32> to vector<8x32xf32>
    %226 = vector.extract_strided_slice %214 {offsets = [0, 64], sizes = [8, 32], strides = [1, 1]} : vector<8x96xf32> to vector<8x32xf32>
    %227 = vector.extract_strided_slice %215 {offsets = [0, 64], sizes = [8, 32], strides = [1, 1]} : vector<8x96xf32> to vector<8x32xf32>
    %228 = vector.broadcast %3 : vector<1x32xf32> to vector<8x32xf32>
    %229 = arith.addf %227, %228 : vector<8x32xf32>
    %230 = arith.mulf %224, %229 : vector<8x32xf32>
    %231 = arith.addf %226, %230 : vector<8x32xf32>
    %232 = math.tanh %231 : vector<8x32xf32>
    %cst_49 = arith.constant 1.000000e+00 : f32
    %233 = vector.broadcast %cst_49 : f32 to vector<8x32xf32>
    %234 = arith.subf %233, %225 : vector<8x32xf32>
    %235 = arith.mulf %234, %232 : vector<8x32xf32>
    %236 = arith.mulf %225, %187 : vector<8x32xf32>
    %237 = arith.addf %235, %236 : vector<8x32xf32>
    %cst_50 = arith.constant dense<0.000000e+00> : vector<8x96xf32>
    %238 = tpu.matmul %237, %4, %cst_50 {dimension_numbers = #tpu.dot_dimension_numbers<[1], [0], [0], [1], [0, 0, 1, 1], [], []>} : vector<8x32xf32>, vector<32x96xf32>, vector<8x96xf32> -> vector<8x96xf32>
    %239 = vector.broadcast %6 : vector<1x96xf32> to vector<8x96xf32>
    %240 = arith.addf %238, %239 : vector<8x96xf32>
    %cst_51 = arith.constant dense<0.000000e+00> : vector<8x96xf32>
    %241 = tpu.matmul %213, %5, %cst_51 {dimension_numbers = #tpu.dot_dimension_numbers<[1], [0], [0], [1], [0, 0, 1, 1], [], []>} : vector<8x32xf32>, vector<32x96xf32>, vector<8x96xf32> -> vector<8x96xf32>
    %242 = vector.extract_strided_slice %240 {offsets = [0, 0], sizes = [8, 64], strides = [1, 1]} : vector<8x96xf32> to vector<8x64xf32>
    %243 = vector.extract_strided_slice %241 {offsets = [0, 0], sizes = [8, 64], strides = [1, 1]} : vector<8x96xf32> to vector<8x64xf32>
    %244 = arith.addf %242, %243 : vector<8x64xf32>
    %245 = arith.negf %244 : vector<8x64xf32>
    %246 = math.exp %245 : vector<8x64xf32>
    %cst_52 = arith.constant 1.000000e+00 : f32
    %247 = vector.broadcast %cst_52 : f32 to vector<8x64xf32>
    %248 = arith.addf %247, %246 : vector<8x64xf32>
    %249 = arith.divf %247, %248 : vector<8x64xf32>
    %250 = vector.extract_strided_slice %249 {offsets = [0, 0], sizes = [8, 32], strides = [1, 1]} : vector<8x64xf32> to vector<8x32xf32>
    %251 = vector.extract_strided_slice %249 {offsets = [0, 32], sizes = [8, 32], strides = [1, 1]} : vector<8x64xf32> to vector<8x32xf32>
    %252 = vector.extract_strided_slice %240 {offsets = [0, 64], sizes = [8, 32], strides = [1, 1]} : vector<8x96xf32> to vector<8x32xf32>
    %253 = vector.extract_strided_slice %241 {offsets = [0, 64], sizes = [8, 32], strides = [1, 1]} : vector<8x96xf32> to vector<8x32xf32>
    %254 = vector.broadcast %7 : vector<1x32xf32> to vector<8x32xf32>
    %255 = arith.addf %253, %254 : vector<8x32xf32>
    %256 = arith.mulf %250, %255 : vector<8x32xf32>
    %257 = arith.addf %252, %256 : vector<8x32xf32>
    %258 = math.tanh %257 : vector<8x32xf32>
    %cst_53 = arith.constant 1.000000e+00 : f32
    %259 = vector.broadcast %cst_53 : f32 to vector<8x32xf32>
    %260 = arith.subf %259, %251 : vector<8x32xf32>
    %261 = arith.mulf %260, %258 : vector<8x32xf32>
    %262 = arith.mulf %251, %213 : vector<8x32xf32>
    %263 = arith.addf %261, %262 : vector<8x32xf32>
    %264 = vector.extract_strided_slice %11 {offsets = [40, 0], sizes = [8, 96], strides = [1, 1]} : vector<64x96xf32> to vector<8x96xf32>
    %cst_54 = arith.constant dense<0.000000e+00> : vector<8x96xf32>
    %265 = tpu.matmul %237, %1, %cst_54 {dimension_numbers = #tpu.dot_dimension_numbers<[1], [0], [0], [1], [0, 0, 1, 1], [], []>} : vector<8x32xf32>, vector<32x96xf32>, vector<8x96xf32> -> vector<8x96xf32>
    %266 = vector.extract_strided_slice %264 {offsets = [0, 0], sizes = [8, 64], strides = [1, 1]} : vector<8x96xf32> to vector<8x64xf32>
    %267 = vector.extract_strided_slice %265 {offsets = [0, 0], sizes = [8, 64], strides = [1, 1]} : vector<8x96xf32> to vector<8x64xf32>
    %268 = arith.addf %266, %267 : vector<8x64xf32>
    %269 = arith.negf %268 : vector<8x64xf32>
    %270 = math.exp %269 : vector<8x64xf32>
    %cst_55 = arith.constant 1.000000e+00 : f32
    %271 = vector.broadcast %cst_55 : f32 to vector<8x64xf32>
    %272 = arith.addf %271, %270 : vector<8x64xf32>
    %273 = arith.divf %271, %272 : vector<8x64xf32>
    %274 = vector.extract_strided_slice %273 {offsets = [0, 0], sizes = [8, 32], strides = [1, 1]} : vector<8x64xf32> to vector<8x32xf32>
    %275 = vector.extract_strided_slice %273 {offsets = [0, 32], sizes = [8, 32], strides = [1, 1]} : vector<8x64xf32> to vector<8x32xf32>
    %276 = vector.extract_strided_slice %264 {offsets = [0, 64], sizes = [8, 32], strides = [1, 1]} : vector<8x96xf32> to vector<8x32xf32>
    %277 = vector.extract_strided_slice %265 {offsets = [0, 64], sizes = [8, 32], strides = [1, 1]} : vector<8x96xf32> to vector<8x32xf32>
    %278 = vector.broadcast %3 : vector<1x32xf32> to vector<8x32xf32>
    %279 = arith.addf %277, %278 : vector<8x32xf32>
    %280 = arith.mulf %274, %279 : vector<8x32xf32>
    %281 = arith.addf %276, %280 : vector<8x32xf32>
    %282 = math.tanh %281 : vector<8x32xf32>
    %cst_56 = arith.constant 1.000000e+00 : f32
    %283 = vector.broadcast %cst_56 : f32 to vector<8x32xf32>
    %284 = arith.subf %283, %275 : vector<8x32xf32>
    %285 = arith.mulf %284, %282 : vector<8x32xf32>
    %286 = arith.mulf %275, %237 : vector<8x32xf32>
    %287 = arith.addf %285, %286 : vector<8x32xf32>
    %cst_57 = arith.constant dense<0.000000e+00> : vector<8x96xf32>
    %288 = tpu.matmul %287, %4, %cst_57 {dimension_numbers = #tpu.dot_dimension_numbers<[1], [0], [0], [1], [0, 0, 1, 1], [], []>} : vector<8x32xf32>, vector<32x96xf32>, vector<8x96xf32> -> vector<8x96xf32>
    %289 = vector.broadcast %6 : vector<1x96xf32> to vector<8x96xf32>
    %290 = arith.addf %288, %289 : vector<8x96xf32>
    %cst_58 = arith.constant dense<0.000000e+00> : vector<8x96xf32>
    %291 = tpu.matmul %263, %5, %cst_58 {dimension_numbers = #tpu.dot_dimension_numbers<[1], [0], [0], [1], [0, 0, 1, 1], [], []>} : vector<8x32xf32>, vector<32x96xf32>, vector<8x96xf32> -> vector<8x96xf32>
    %292 = vector.extract_strided_slice %290 {offsets = [0, 0], sizes = [8, 64], strides = [1, 1]} : vector<8x96xf32> to vector<8x64xf32>
    %293 = vector.extract_strided_slice %291 {offsets = [0, 0], sizes = [8, 64], strides = [1, 1]} : vector<8x96xf32> to vector<8x64xf32>
    %294 = arith.addf %292, %293 : vector<8x64xf32>
    %295 = arith.negf %294 : vector<8x64xf32>
    %296 = math.exp %295 : vector<8x64xf32>
    %cst_59 = arith.constant 1.000000e+00 : f32
    %297 = vector.broadcast %cst_59 : f32 to vector<8x64xf32>
    %298 = arith.addf %297, %296 : vector<8x64xf32>
    %299 = arith.divf %297, %298 : vector<8x64xf32>
    %300 = vector.extract_strided_slice %299 {offsets = [0, 0], sizes = [8, 32], strides = [1, 1]} : vector<8x64xf32> to vector<8x32xf32>
    %301 = vector.extract_strided_slice %299 {offsets = [0, 32], sizes = [8, 32], strides = [1, 1]} : vector<8x64xf32> to vector<8x32xf32>
    %302 = vector.extract_strided_slice %290 {offsets = [0, 64], sizes = [8, 32], strides = [1, 1]} : vector<8x96xf32> to vector<8x32xf32>
    %303 = vector.extract_strided_slice %291 {offsets = [0, 64], sizes = [8, 32], strides = [1, 1]} : vector<8x96xf32> to vector<8x32xf32>
    %304 = vector.broadcast %7 : vector<1x32xf32> to vector<8x32xf32>
    %305 = arith.addf %303, %304 : vector<8x32xf32>
    %306 = arith.mulf %300, %305 : vector<8x32xf32>
    %307 = arith.addf %302, %306 : vector<8x32xf32>
    %308 = math.tanh %307 : vector<8x32xf32>
    %cst_60 = arith.constant 1.000000e+00 : f32
    %309 = vector.broadcast %cst_60 : f32 to vector<8x32xf32>
    %310 = arith.subf %309, %301 : vector<8x32xf32>
    %311 = arith.mulf %310, %308 : vector<8x32xf32>
    %312 = arith.mulf %301, %263 : vector<8x32xf32>
    %313 = arith.addf %311, %312 : vector<8x32xf32>
    %314 = vector.extract_strided_slice %11 {offsets = [48, 0], sizes = [8, 96], strides = [1, 1]} : vector<64x96xf32> to vector<8x96xf32>
    %cst_61 = arith.constant dense<0.000000e+00> : vector<8x96xf32>
    %315 = tpu.matmul %287, %1, %cst_61 {dimension_numbers = #tpu.dot_dimension_numbers<[1], [0], [0], [1], [0, 0, 1, 1], [], []>} : vector<8x32xf32>, vector<32x96xf32>, vector<8x96xf32> -> vector<8x96xf32>
    %316 = vector.extract_strided_slice %314 {offsets = [0, 0], sizes = [8, 64], strides = [1, 1]} : vector<8x96xf32> to vector<8x64xf32>
    %317 = vector.extract_strided_slice %315 {offsets = [0, 0], sizes = [8, 64], strides = [1, 1]} : vector<8x96xf32> to vector<8x64xf32>
    %318 = arith.addf %316, %317 : vector<8x64xf32>
    %319 = arith.negf %318 : vector<8x64xf32>
    %320 = math.exp %319 : vector<8x64xf32>
    %cst_62 = arith.constant 1.000000e+00 : f32
    %321 = vector.broadcast %cst_62 : f32 to vector<8x64xf32>
    %322 = arith.addf %321, %320 : vector<8x64xf32>
    %323 = arith.divf %321, %322 : vector<8x64xf32>
    %324 = vector.extract_strided_slice %323 {offsets = [0, 0], sizes = [8, 32], strides = [1, 1]} : vector<8x64xf32> to vector<8x32xf32>
    %325 = vector.extract_strided_slice %323 {offsets = [0, 32], sizes = [8, 32], strides = [1, 1]} : vector<8x64xf32> to vector<8x32xf32>
    %326 = vector.extract_strided_slice %314 {offsets = [0, 64], sizes = [8, 32], strides = [1, 1]} : vector<8x96xf32> to vector<8x32xf32>
    %327 = vector.extract_strided_slice %315 {offsets = [0, 64], sizes = [8, 32], strides = [1, 1]} : vector<8x96xf32> to vector<8x32xf32>
    %328 = vector.broadcast %3 : vector<1x32xf32> to vector<8x32xf32>
    %329 = arith.addf %327, %328 : vector<8x32xf32>
    %330 = arith.mulf %324, %329 : vector<8x32xf32>
    %331 = arith.addf %326, %330 : vector<8x32xf32>
    %332 = math.tanh %331 : vector<8x32xf32>
    %cst_63 = arith.constant 1.000000e+00 : f32
    %333 = vector.broadcast %cst_63 : f32 to vector<8x32xf32>
    %334 = arith.subf %333, %325 : vector<8x32xf32>
    %335 = arith.mulf %334, %332 : vector<8x32xf32>
    %336 = arith.mulf %325, %287 : vector<8x32xf32>
    %337 = arith.addf %335, %336 : vector<8x32xf32>
    %cst_64 = arith.constant dense<0.000000e+00> : vector<8x96xf32>
    %338 = tpu.matmul %337, %4, %cst_64 {dimension_numbers = #tpu.dot_dimension_numbers<[1], [0], [0], [1], [0, 0, 1, 1], [], []>} : vector<8x32xf32>, vector<32x96xf32>, vector<8x96xf32> -> vector<8x96xf32>
    %339 = vector.broadcast %6 : vector<1x96xf32> to vector<8x96xf32>
    %340 = arith.addf %338, %339 : vector<8x96xf32>
    %cst_65 = arith.constant dense<0.000000e+00> : vector<8x96xf32>
    %341 = tpu.matmul %313, %5, %cst_65 {dimension_numbers = #tpu.dot_dimension_numbers<[1], [0], [0], [1], [0, 0, 1, 1], [], []>} : vector<8x32xf32>, vector<32x96xf32>, vector<8x96xf32> -> vector<8x96xf32>
    %342 = vector.extract_strided_slice %340 {offsets = [0, 0], sizes = [8, 64], strides = [1, 1]} : vector<8x96xf32> to vector<8x64xf32>
    %343 = vector.extract_strided_slice %341 {offsets = [0, 0], sizes = [8, 64], strides = [1, 1]} : vector<8x96xf32> to vector<8x64xf32>
    %344 = arith.addf %342, %343 : vector<8x64xf32>
    %345 = arith.negf %344 : vector<8x64xf32>
    %346 = math.exp %345 : vector<8x64xf32>
    %cst_66 = arith.constant 1.000000e+00 : f32
    %347 = vector.broadcast %cst_66 : f32 to vector<8x64xf32>
    %348 = arith.addf %347, %346 : vector<8x64xf32>
    %349 = arith.divf %347, %348 : vector<8x64xf32>
    %350 = vector.extract_strided_slice %349 {offsets = [0, 0], sizes = [8, 32], strides = [1, 1]} : vector<8x64xf32> to vector<8x32xf32>
    %351 = vector.extract_strided_slice %349 {offsets = [0, 32], sizes = [8, 32], strides = [1, 1]} : vector<8x64xf32> to vector<8x32xf32>
    %352 = vector.extract_strided_slice %340 {offsets = [0, 64], sizes = [8, 32], strides = [1, 1]} : vector<8x96xf32> to vector<8x32xf32>
    %353 = vector.extract_strided_slice %341 {offsets = [0, 64], sizes = [8, 32], strides = [1, 1]} : vector<8x96xf32> to vector<8x32xf32>
    %354 = vector.broadcast %7 : vector<1x32xf32> to vector<8x32xf32>
    %355 = arith.addf %353, %354 : vector<8x32xf32>
    %356 = arith.mulf %350, %355 : vector<8x32xf32>
    %357 = arith.addf %352, %356 : vector<8x32xf32>
    %358 = math.tanh %357 : vector<8x32xf32>
    %cst_67 = arith.constant 1.000000e+00 : f32
    %359 = vector.broadcast %cst_67 : f32 to vector<8x32xf32>
    %360 = arith.subf %359, %351 : vector<8x32xf32>
    %361 = arith.mulf %360, %358 : vector<8x32xf32>
    %362 = arith.mulf %351, %313 : vector<8x32xf32>
    %363 = arith.addf %361, %362 : vector<8x32xf32>
    %364 = vector.extract_strided_slice %11 {offsets = [56, 0], sizes = [8, 96], strides = [1, 1]} : vector<64x96xf32> to vector<8x96xf32>
    %cst_68 = arith.constant dense<0.000000e+00> : vector<8x96xf32>
    %365 = tpu.matmul %337, %1, %cst_68 {dimension_numbers = #tpu.dot_dimension_numbers<[1], [0], [0], [1], [0, 0, 1, 1], [], []>} : vector<8x32xf32>, vector<32x96xf32>, vector<8x96xf32> -> vector<8x96xf32>
    %366 = vector.extract_strided_slice %364 {offsets = [0, 0], sizes = [8, 64], strides = [1, 1]} : vector<8x96xf32> to vector<8x64xf32>
    %367 = vector.extract_strided_slice %365 {offsets = [0, 0], sizes = [8, 64], strides = [1, 1]} : vector<8x96xf32> to vector<8x64xf32>
    %368 = arith.addf %366, %367 : vector<8x64xf32>
    %369 = arith.negf %368 : vector<8x64xf32>
    %370 = math.exp %369 : vector<8x64xf32>
    %cst_69 = arith.constant 1.000000e+00 : f32
    %371 = vector.broadcast %cst_69 : f32 to vector<8x64xf32>
    %372 = arith.addf %371, %370 : vector<8x64xf32>
    %373 = arith.divf %371, %372 : vector<8x64xf32>
    %374 = vector.extract_strided_slice %373 {offsets = [0, 0], sizes = [8, 32], strides = [1, 1]} : vector<8x64xf32> to vector<8x32xf32>
    %375 = vector.extract_strided_slice %373 {offsets = [0, 32], sizes = [8, 32], strides = [1, 1]} : vector<8x64xf32> to vector<8x32xf32>
    %376 = vector.extract_strided_slice %364 {offsets = [0, 64], sizes = [8, 32], strides = [1, 1]} : vector<8x96xf32> to vector<8x32xf32>
    %377 = vector.extract_strided_slice %365 {offsets = [0, 64], sizes = [8, 32], strides = [1, 1]} : vector<8x96xf32> to vector<8x32xf32>
    %378 = vector.broadcast %3 : vector<1x32xf32> to vector<8x32xf32>
    %379 = arith.addf %377, %378 : vector<8x32xf32>
    %380 = arith.mulf %374, %379 : vector<8x32xf32>
    %381 = arith.addf %376, %380 : vector<8x32xf32>
    %382 = math.tanh %381 : vector<8x32xf32>
    %cst_70 = arith.constant 1.000000e+00 : f32
    %383 = vector.broadcast %cst_70 : f32 to vector<8x32xf32>
    %384 = arith.subf %383, %375 : vector<8x32xf32>
    %385 = arith.mulf %384, %382 : vector<8x32xf32>
    %386 = arith.mulf %375, %337 : vector<8x32xf32>
    %387 = arith.addf %385, %386 : vector<8x32xf32>
    %cst_71 = arith.constant dense<0.000000e+00> : vector<8x96xf32>
    %388 = tpu.matmul %387, %4, %cst_71 {dimension_numbers = #tpu.dot_dimension_numbers<[1], [0], [0], [1], [0, 0, 1, 1], [], []>} : vector<8x32xf32>, vector<32x96xf32>, vector<8x96xf32> -> vector<8x96xf32>
    %389 = vector.broadcast %6 : vector<1x96xf32> to vector<8x96xf32>
    %390 = arith.addf %388, %389 : vector<8x96xf32>
    %cst_72 = arith.constant dense<0.000000e+00> : vector<8x96xf32>
    %391 = tpu.matmul %363, %5, %cst_72 {dimension_numbers = #tpu.dot_dimension_numbers<[1], [0], [0], [1], [0, 0, 1, 1], [], []>} : vector<8x32xf32>, vector<32x96xf32>, vector<8x96xf32> -> vector<8x96xf32>
    %392 = vector.extract_strided_slice %390 {offsets = [0, 0], sizes = [8, 64], strides = [1, 1]} : vector<8x96xf32> to vector<8x64xf32>
    %393 = vector.extract_strided_slice %391 {offsets = [0, 0], sizes = [8, 64], strides = [1, 1]} : vector<8x96xf32> to vector<8x64xf32>
    %394 = arith.addf %392, %393 : vector<8x64xf32>
    %395 = arith.negf %394 : vector<8x64xf32>
    %396 = math.exp %395 : vector<8x64xf32>
    %cst_73 = arith.constant 1.000000e+00 : f32
    %397 = vector.broadcast %cst_73 : f32 to vector<8x64xf32>
    %398 = arith.addf %397, %396 : vector<8x64xf32>
    %399 = arith.divf %397, %398 : vector<8x64xf32>
    %400 = vector.extract_strided_slice %399 {offsets = [0, 0], sizes = [8, 32], strides = [1, 1]} : vector<8x64xf32> to vector<8x32xf32>
    %401 = vector.extract_strided_slice %399 {offsets = [0, 32], sizes = [8, 32], strides = [1, 1]} : vector<8x64xf32> to vector<8x32xf32>
    %402 = vector.extract_strided_slice %390 {offsets = [0, 64], sizes = [8, 32], strides = [1, 1]} : vector<8x96xf32> to vector<8x32xf32>
    %403 = vector.extract_strided_slice %391 {offsets = [0, 64], sizes = [8, 32], strides = [1, 1]} : vector<8x96xf32> to vector<8x32xf32>
    %404 = vector.broadcast %7 : vector<1x32xf32> to vector<8x32xf32>
    %405 = arith.addf %403, %404 : vector<8x32xf32>
    %406 = arith.mulf %400, %405 : vector<8x32xf32>
    %407 = arith.addf %402, %406 : vector<8x32xf32>
    %408 = math.tanh %407 : vector<8x32xf32>
    %cst_74 = arith.constant 1.000000e+00 : f32
    %409 = vector.broadcast %cst_74 : f32 to vector<8x32xf32>
    %410 = arith.subf %409, %401 : vector<8x32xf32>
    %411 = arith.mulf %410, %408 : vector<8x32xf32>
    %412 = arith.mulf %401, %363 : vector<8x32xf32>
    %413 = arith.addf %411, %412 : vector<8x32xf32>
    %c0_75 = arith.constant 0 : index
    %c0_76 = arith.constant 0 : index
    %414 = vector.load %arg9[%c0_75, %c0_76] : memref<32x128xf32, #tpu.memory_space<vmem>>, vector<32x128xf32>
    %cst_77 = arith.constant dense<0.000000e+00> : vector<8x128xf32>
    %415 = tpu.matmul %413, %414, %cst_77 {dimension_numbers = #tpu.dot_dimension_numbers<[1], [0], [0], [1], [0, 0, 1, 1], [], []>} : vector<8x32xf32>, vector<32x128xf32>, vector<8x128xf32> -> vector<8x128xf32>
    %c0_78 = arith.constant 0 : index
    %c0_79 = arith.constant 0 : index
    %416 = vector.load %arg10[%c0_78, %c0_79] : memref<1x128xf32, #tpu.memory_space<vmem>>, vector<1x128xf32>
    %417 = vector.broadcast %416 : vector<1x128xf32> to vector<8x128xf32>
    %418 = arith.addf %415, %417 : vector<8x128xf32>
    %c0_80 = arith.constant 0 : index
    %c0_81 = arith.constant 0 : index
    %419 = vector.load %arg11[%c0_80, %c0_81] : memref<8x128xf32, #tpu.memory_space<vmem>>, vector<8x128xf32>
    tpu.vector_store %arg11[%c0_80, %c0_81], %418 {strides = array<i32>} : memref<8x128xf32, #tpu.memory_space<vmem>>, vector<8x128xf32>,
    return
  }
}

</mosaic_0001>

<llo_original>
// kernel: tpu_custom_call.1
$region0: #{tpu_custom_call.1}
  #allocation0 [shape = 'u32[]', space=smem, size = 0x4, offset = 0x4, fixed_abs, tag = 'smem constant byte address 0x4 - core index']
  #allocation1 [shape = 'u32[72,128]{1,0:T(1,128)}', space=vmem, size = 0x9000, scoped, tag = 'internal scratch']
  %s0 = inlined_call_operand.vmem [shape: f32[64,16], index: 0, kind: input, shape index: {}]
  %s1 = inlined_call_operand.vmem [shape: f32[16,96], index: 1, kind: input, shape index: {}]
  %s2 = inlined_call_operand.vmem [shape: f32[32,96], index: 2, kind: input, shape index: {}]
  %s3 = inlined_call_operand.vmem [shape: f32[1,96], index: 3, kind: input, shape index: {}]
  %s4 = inlined_call_operand.vmem [shape: f32[1,32], index: 4, kind: input, shape index: {}]
  %s5 = inlined_call_operand.vmem [shape: f32[32,96], index: 5, kind: input, shape index: {}]
  %s6 = inlined_call_operand.hbm [shape: f32[32,96], index: 6, kind: input, shape index: {}]
  %s7 = inlined_call_operand.vmem [shape: f32[1,96], index: 7, kind: input, shape index: {}]
  %s8 = inlined_call_operand.vmem [shape: f32[1,32], index: 8, kind: input, shape index: {}]
  %s9 = inlined_call_operand.hbm [shape: f32[32,128], index: 9, kind: input, shape index: {}]
  %s10 = inlined_call_operand.vmem [shape: f32[1,128], index: 10, kind: input, shape index: {}]
  %s11 = inlined_call_operand.hbm [shape: f32[8,128], index: 11, kind: output, shape index: {}]
  %s12 = sld [smem:[#allocation0]]
  $region62: #{tpu_custom_call.1} parent=0
    _
  %s14 = ssub.s32 1, %s12
  %s15 = scalar_select 0, %s14, %s12
  $region1: #{tpu_custom_call.1} parent=0
    #allocation2 [shape = 'u8[16384]{0}', space=vmem, size = 0x4000, scoped, tag = 'input window, operand 6, single buffered']
    #allocation3 [shape = 's32[1]{0}', space=sflag, size = 0x4, scoped, tag = 'scoped memory for tpu_custom_call.1']
    #allocation4 [shape = 's32[1]{0}', space=sflag, size = 0x4, scoped, tag = 'scoped memory for tpu_custom_call.1']
    #allocation5 [shape = 'u8[16384]{0}', space=vmem, size = 0x4000, scoped, tag = 'input window, operand 9, single buffered']
    #allocation6 [shape = 's32[1]{0}', space=sflag, size = 0x4, scoped, tag = 'scoped memory for tpu_custom_call.1']
    #allocation7 [shape = 'u8[4096]{0}', space=vmem, size = 0x1000, scoped, tag = 'output window, operand 0, single buffered']
    %16 = vsyncpa [#allocation3], 0
    %17 = vsyncpa [#allocation6], 0
    %18 = vsyncpa [#allocation4], 0
    // Predicated region
    $region2: #{tpu_custom_call.1} parent=1 // pred_check
      _
    $region3: #{tpu_custom_call.1} parent=1 // pred_check_branch
      %20 = sbr.rel (0) target = $region5
    $region4: #{tpu_custom_call.1} parent=1 // pred_region
      _
    $region5: #{tpu_custom_call.1} parent=1 // pred_fallthru
      _
    // Predicated region
    $region6: #{tpu_custom_call.1} parent=1 // pred_check
      _
    $region7: #{tpu_custom_call.1} parent=1 // pred_check_branch
      %22 = sbr.rel (0) target = $region9
    $region8: #{tpu_custom_call.1} parent=1 // pred_region
      _
    $region9: #{tpu_custom_call.1} parent=1 // pred_fallthru
      _
    // Predicated region
    $region10: #{tpu_custom_call.1} parent=1 // pred_check
      _
    $region11: #{tpu_custom_call.1} parent=1 // pred_check_branch
      %24 = sbr.rel (0) target = $region13
    $region12: #{tpu_custom_call.1} parent=1 // pred_region
      _
    $region13: #{tpu_custom_call.1} parent=1 // pred_fallthru
      _
    // Predicated region
    $region14: #{tpu_custom_call.1} parent=1 // pred_check
      _
    $region15: #{tpu_custom_call.1} parent=1 // pred_check_branch
      %26 = sbr.rel (0) target = $region17
    $region16: #{tpu_custom_call.1} parent=1 // pred_region
      _
    $region17: #{tpu_custom_call.1} parent=1 // pred_fallthru
      _
    // Predicated region
    $region18: #{tpu_custom_call.1} parent=1 // pred_check
      _
    $region19: #{tpu_custom_call.1} parent=1 // pred_check_branch
      %28 = sbr.rel (0) target = $region21
    $region20: #{tpu_custom_call.1} parent=1 // pred_region
      _
    $region21: #{tpu_custom_call.1} parent=1 // pred_fallthru
      _
    // Predicated region
    $region22: #{tpu_custom_call.1} parent=1 // pred_check
      _
    $region23: #{tpu_custom_call.1} parent=1 // pred_check_branch
      %30 = sbr.rel (0) target = $region25
    $region24: #{tpu_custom_call.1} parent=1 // pred_region
      _
    $region25: #{tpu_custom_call.1} parent=1 // pred_fallthru
      _
    // Predicated region
    $region26: #{tpu_custom_call.1} parent=1 // pred_check
      _
    $region27: #{tpu_custom_call.1} parent=1 // pred_check_branch
      %32 = sbr.rel (0) target = $region29
    $region28: #{tpu_custom_call.1} parent=1 // pred_region
      %34 = vsyncadd [#allocation3], 0
      %s35 = sshll.u32 %s6, 4
      %s36 = int_to_ptr.hbm [resolvable:$true] %s35
      %s37 = sshll.u32 [#allocation2], 4
      %s38 = int_to_ptr.vmem [resolvable:$true] %s37
      %43 = dma.hbm_to_vmem [thread:$0]  %s36, 512, %s38, [#allocation3], 128, 128, 8
    $region29: #{tpu_custom_call.1} parent=1 // pred_fallthru
      _
    // Predicated region
    $region30: #{tpu_custom_call.1} parent=1 // pred_check
      _
    $region31: #{tpu_custom_call.1} parent=1 // pred_check_branch
      %45 = sbr.rel (0) target = $region33
    $region32: #{tpu_custom_call.1} parent=1 // pred_region
      _
    $region33: #{tpu_custom_call.1} parent=1 // pred_fallthru
      _
    // Predicated region
    $region34: #{tpu_custom_call.1} parent=1 // pred_check
      _
    $region35: #{tpu_custom_call.1} parent=1 // pred_check_branch
      %47 = sbr.rel (0) target = $region37
    $region36: #{tpu_custom_call.1} parent=1 // pred_region
      _
    $region37: #{tpu_custom_call.1} parent=1 // pred_fallthru
      _
    // Predicated region
    $region38: #{tpu_custom_call.1} parent=1 // pred_check
      _
    $region39: #{tpu_custom_call.1} parent=1 // pred_check_branch
      %49 = sbr.rel (0) target = $region41
    $region40: #{tpu_custom_call.1} parent=1 // pred_region
      %51 = vsyncadd [#allocation6], 0
      %s52 = sshll.u32 %s9, 4
      %s53 = int_to_ptr.hbm [resolvable:$true] %s52
      %s54 = sshll.u32 [#allocation5], 4
      %s55 = int_to_ptr.vmem [resolvable:$true] %s54
      %60 = dma.hbm_to_vmem [thread:$0]  %s53, 512, %s55, [#allocation6], 128, 128, 8
    $region41: #{tpu_custom_call.1} parent=1 // pred_fallthru
      _
    // Predicated region
    $region42: #{tpu_custom_call.1} parent=1 // pred_check
      _
    $region43: #{tpu_custom_call.1} parent=1 // pred_check_branch
      %62 = sbr.rel (0) target = $region45
    $region44: #{tpu_custom_call.1} parent=1 // pred_region
      _
    $region45: #{tpu_custom_call.1} parent=1 // pred_fallthru
      _
    // Predicated region
    $region46: #{tpu_custom_call.1} parent=1 // pred_check
      _
    $region47: #{tpu_custom_call.1} parent=1 // pred_check_branch
      %64 = sbr.rel (0) target = $region49
    $region48: #{tpu_custom_call.1} parent=1 // pred_region
      %66 = dma.done [#allocation3], 512
    $region49: #{tpu_custom_call.1} parent=1 // pred_fallthru
      _
    // Predicated region
    $region50: #{tpu_custom_call.1} parent=1 // pred_check
      _
    $region51: #{tpu_custom_call.1} parent=1 // pred_check_branch
      %68 = sbr.rel (0) target = $region53
    $region52: #{tpu_custom_call.1} parent=1 // pred_region
      %70 = dma.done [#allocation6], 512
    $region53: #{tpu_custom_call.1} parent=1 // pred_fallthru
      _
    %v71 = vld [vmem:[%s1] sm:$0xff]
    %v72 = vld [vmem:[%s1 + $0x8] sm:$0xff]
    %v73 = vld [vmem:[%s2] sm:$0xff]
    %v74 = vld [vmem:[%s2 + $0x8] sm:$0xff]
    %v75 = vld [vmem:[%s2 + $0x10] sm:$0xff]
    %v76 = vld [vmem:[%s2 + $0x18] sm:$0xff]
    %v77 = vld [vmem:[%s3] sm:$0x1]
    %v78 = vld [vmem:[%s4] sm:$0x1]
    %v79 = vld [vmem:[%s5] sm:$0xff]
    %v80 = vld [vmem:[%s5 + $0x8] sm:$0xff]
    %v81 = vld [vmem:[%s5 + $0x10] sm:$0xff]
    %v82 = vld [vmem:[%s5 + $0x18] sm:$0xff]
    %v83 = vld [vmem:[#allocation2] sm:$0xff]
    %v84 = vld [vmem:[#allocation2 + $0x8] sm:$0xff]
    %v85 = vld [vmem:[#allocation2 + $0x10] sm:$0xff]
    %v86 = vld [vmem:[#allocation2 + $0x18] sm:$0xff]
    %v87 = vld [vmem:[%s7] sm:$0x1]
    %v88 = vld [vmem:[%s8] sm:$0x1]
    %v89 = vld [vmem:[%s0] sm:$0xff]
    %v90 = vld [vmem:[%s0 + $0x8] sm:$0xff]
    %v91 = vld [vmem:[%s0 + $0x10] sm:$0xff]
    %v92 = vld [vmem:[%s0 + $0x18] sm:$0xff]
    %v93 = vld [vmem:[%s0 + $0x20] sm:$0xff]
    %v94 = vld [vmem:[%s0 + $0x28] sm:$0xff]
    %v95 = vld [vmem:[%s0 + $0x30] sm:$0xff]
    %v96 = vld [vmem:[%s0 + $0x38] sm:$0xff]
    %v98 = vperm.slane %v77, 0
    %vm100 = vcmask 130048
    %v102 = vsel %vm100, %v89, 0
    %v105 = vsel %vm100, %v90, 0
    %v108 = vsel %vm100, %v91, 0
    %v111 = vsel %vm100, %v92, 0
    %v114 = vsel %vm100, %v93, 0
    %v117 = vsel %vm100, %v94, 0
    %v120 = vsel %vm100, %v95, 0
    %v123 = vsel %vm100, %v96, 0
    %125 = vmatpush.msra.mxu0 0.0
    %126 = vmatpush.msra.mxu0 0.0
    %127 = vmatpush.msra.mxu0 0.0
    %128 = vmatpush.msra.mxu0 0.0
    %129 = vmatpush.msra.mxu0 0.0
    %130 = vmatpush.msra.mxu0 0.0
    %131 = vmatpush.msra.mxu0 0.0
    %132 = vmatpush.msra.mxu0 0.0
    %133 = vmatpush.msra.mxu0 0.0
    %134 = vmatpush.msra.mxu0 0.0
    %135 = vmatpush.msra.mxu0 0.0
    %136 = vmatpush.msra.mxu0 0.0
    %137 = vmatpush.msra.mxu0 0.0
    %138 = vmatpush.msra.mxu0 0.0
    %139 = vmatpush.msra.mxu0 %v72
    %140 = vmatpush.msra.mxu0 %v71
    %141 = vmatmul.f32.gmra.mxu0 %v102
    %v142 = vpop.f32.mrf.mxu0
    %v143 = vadd.f32 %v98, %v142
    %144 = vmatmul.f32.gmra.mxu0 %v105
    %v145 = vpop.f32.mrf.mxu0
    %v146 = vadd.f32 %v98, %v145
    %147 = vmatmul.f32.gmra.mxu0 %v108
    %v148 = vpop.f32.mrf.mxu0
    %v149 = vadd.f32 %v98, %v148
    %150 = vmatmul.f32.gmra.mxu0 %v111
    %v151 = vpop.f32.mrf.mxu0
    %v152 = vadd.f32 %v98, %v151
    %153 = vmatmul.f32.gmra.mxu0 %v114
    %v154 = vpop.f32.mrf.mxu0
    %v155 = vadd.f32 %v98, %v154
    %156 = vmatmul.f32.gmra.mxu0 %v117
    %v157 = vpop.f32.mrf.mxu0
    %v158 = vadd.f32 %v98, %v157
    %159 = vmatmul.f32.gmra.mxu0 %v120
    %v160 = vpop.f32.mrf.mxu0
    %v161 = vadd.f32 %v98, %v160
    %162 = vmatmul.f32.gmra.mxu0 %v123
    %v163 = vpop.f32.mrf.mxu0
    %v164 = vadd.f32 %v98, %v163
    %165 = vdwg.mxu0
    %vm166 = vcmask 261120
    %v168 = vsel %vm166, 0.0, 0
    %170 = vmatpush.msra.mxu0 0.0
    %171 = vmatpush.msra.mxu0 0.0
    %172 = vmatpush.msra.mxu0 0.0
    %173 = vmatpush.msra.mxu0 0.0
    %174 = vmatpush.msra.mxu0 0.0
    %175 = vmatpush.msra.mxu0 0.0
    %176 = vmatpush.msra.mxu0 0.0
    %177 = vmatpush.msra.mxu0 0.0
    %178 = vmatpush.msra.mxu0 0.0
    %179 = vmatpush.msra.mxu0 0.0
    %180 = vmatpush.msra.mxu0 0.0
    %181 = vmatpush.msra.mxu0 0.0
    %182 = vmatpush.msra.mxu0 %v76
    %183 = vmatpush.msra.mxu0 %v75
    %184 = vmatpush.msra.mxu0 %v74
    %185 = vmatpush.msra.mxu0 %v73
    %186 = vmatmul.f32.gmra.mxu0 %v168
    %v187 = vpop.f32.mrf.mxu0
    %v188 = vadd.f32 0.0, %v187
    %189 = vdwg.mxu0
    %v190 = vadd.f32 %v143, %v188
    %v191 = vxor.u32 %v190, 2147483648
    %v192 = vmul.f32 %v191, 1.442695
    %v193 = vpow.pop %v192
    %v194 = vadd.f32 %v193, 1.0
    %v195 = vrcp.pop %v194
    %v196 = vmul.f32 %v194, %v195
    %v197 = vsub.f32 1.0, %v196
    %v198 = vmul.f32 %v195, %v197
    %v199 = vadd.f32 %v195, %v198
    %vm200 = vweird.f32 %v194
    %vm201 = vweird.f32 %v195
    %vm202 = vmor %vm200, %vm201
    %v203 = vsel %vm202, %v195, %v199
    %v204 = vand.u32 2147483647, %v194
    %vm205 = vcmp.eq.f32.partialorder %v204, 8.507059e+37
    %v206 = vand.u32 %v194, 2147483648
    %v207 = vor.u32 1.1754944e-38, %v206
    %v208 = vsel %vm205, %v207, %v203
    %v209 = vmul.f32 1.0, %v208
    %v211 = vperm.slane %v78, 0
    %212 = vrot.lane.b32.xlu0 %v211, 64
    %v213 = vpop.permute.xlu0 %212
    %v215 = vadd.f32 %v188, %v213
    %217 = vrot.lane.b32.xlu0 %v215, 64
    %v218 = vpop.permute.xlu0 %217
    %v220 = vmul.f32 %v209, %v218
    %222 = vrot.lane.b32.xlu0 %v220, 64
    %v223 = vpop.permute.xlu0 %222
    %v225 = vadd.f32 %v143, %v223
    %v226 = vtanh.pop %v225
    %v227 = vsub.f32 1.0, %v209
    %229 = vrot.lane.b32.xlu0 %v226, 96
    %v230 = vpop.permute.xlu0 %229
    %v232 = vmul.f32 %v227, %v230
    %v233 = vmul.f32 %v209, 0.0
    %v234 = vadd.f32 %v232, %v233
    %v236 = vperm.slane %v87, 0
    %239 = vrot.lane.b32.xlu0 %v234, 96
    %v240 = vpop.permute.xlu0 %239
    %v241 = vsel %vm166, %v240, 0
    %243 = vmatpush.msra.mxu0 0.0
    %244 = vmatpush.msra.mxu0 0.0
    %245 = vmatpush.msra.mxu0 0.0
    %246 = vmatpush.msra.mxu0 0.0
    %247 = vmatpush.msra.mxu0 0.0
    %248 = vmatpush.msra.mxu0 0.0
    %249 = vmatpush.msra.mxu0 0.0
    %250 = vmatpush.msra.mxu0 0.0
    %251 = vmatpush.msra.mxu0 0.0
    %252 = vmatpush.msra.mxu0 0.0
    %253 = vmatpush.msra.mxu0 0.0
    %254 = vmatpush.msra.mxu0 0.0
    %255 = vmatpush.msra.mxu0 %v82
    %256 = vmatpush.msra.mxu0 %v81
    %257 = vmatpush.msra.mxu0 %v80
    %258 = vmatpush.msra.mxu0 %v79
    %259 = vmatmul.f32.gmra.mxu0 %v241
    %v260 = vpop.f32.mrf.mxu0
    %v261 = vadd.f32 %v236, %v260
    %262 = vdwg.mxu0
    %263 = vmatpush.msra.mxu0 0.0
    %264 = vmatpush.msra.mxu0 0.0
    %265 = vmatpush.msra.mxu0 0.0
    %266 = vmatpush.msra.mxu0 0.0
    %267 = vmatpush.msra.mxu0 0.0
    %268 = vmatpush.msra.mxu0 0.0
    %269 = vmatpush.msra.mxu0 0.0
    %270 = vmatpush.msra.mxu0 0.0
    %271 = vmatpush.msra.mxu0 0.0
    %272 = vmatpush.msra.mxu0 0.0
    %273 = vmatpush.msra.mxu0 0.0
    %274 = vmatpush.msra.mxu0 0.0
    %275 = vmatpush.msra.mxu0 %v86
    %276 = vmatpush.msra.mxu0 %v85
    %277 = vmatpush.msra.mxu0 %v84
    %278 = vmatpush.msra.mxu0 %v83
    %279 = vmatmul.f32.gmra.mxu0 %v168
    %v280 = vpop.f32.mrf.mxu0
    %v281 = vadd.f32 0.0, %v280
    %282 = vdwg.mxu0
    %v283 = vadd.f32 %v261, %v281
    %v284 = vxor.u32 %v283, 2147483648
    %v285 = vmul.f32 %v284, 1.442695
    %v286 = vpow.pop %v285
    %v287 = vadd.f32 %v286, 1.0
    %v288 = vrcp.pop %v287
    %v289 = vmul.f32 %v287, %v288
    %v290 = vsub.f32 1.0, %v289
    %v291 = vmul.f32 %v288, %v290
    %v292 = vadd.f32 %v288, %v291
    %vm293 = vweird.f32 %v287
    %vm294 = vweird.f32 %v288
    %vm295 = vmor %vm293, %vm294
    %v296 = vsel %vm295, %v288, %v292
    %v297 = vand.u32 2147483647, %v287
    %vm298 = vcmp.eq.f32.partialorder %v297, 8.507059e+37
    %v299 = vand.u32 %v287, 2147483648
    %v300 = vor.u32 1.1754944e-38, %v299
    %v301 = vsel %vm298, %v300, %v296
    %v302 = vmul.f32 1.0, %v301
    %v304 = vperm.slane %v88, 0
    %305 = vrot.lane.b32.xlu0 %v304, 64
    %v306 = vpop.permute.xlu0 %305
    %v308 = vadd.f32 %v281, %v306
    %310 = vrot.lane.b32.xlu0 %v308, 64
    %v311 = vpop.permute.xlu0 %310
    %v313 = vmul.f32 %v302, %v311
    %315 = vrot.lane.b32.xlu0 %v313, 64
    %v316 = vpop.permute.xlu0 %315
    %v318 = vadd.f32 %v261, %v316
    %v319 = vtanh.pop %v318
    %v320 = vsub.f32 1.0, %v302
    %322 = vrot.lane.b32.xlu0 %v319, 96
    %v323 = vpop.permute.xlu0 %322
    %v325 = vmul.f32 %v320, %v323
    %v326 = vmul.f32 %v302, 0.0
    %v327 = vadd.f32 %v325, %v326
    %328 = vmatpush.msra.mxu0 0.0
    %329 = vmatpush.msra.mxu0 0.0
    %330 = vmatpush.msra.mxu0 0.0
    %331 = vmatpush.msra.mxu0 0.0
    %332 = vmatpush.msra.mxu0 0.0
    %333 = vmatpush.msra.mxu0 0.0
    %334 = vmatpush.msra.mxu0 0.0
    %335 = vmatpush.msra.mxu0 0.0
    %336 = vmatpush.msra.mxu0 0.0
    %337 = vmatpush.msra.mxu0 0.0
    %338 = vmatpush.msra.mxu0 0.0
    %339 = vmatpush.msra.mxu0 0.0
    %340 = vmatpush.msra.mxu0 %v76
    %341 = vmatpush.msra.mxu0 %v75
    %342 = vmatpush.msra.mxu0 %v74
    %343 = vmatpush.msra.mxu0 %v73
    %344 = vmatmul.f32.gmra.mxu0 %v241
    %v345 = vpop.f32.mrf.mxu0
    %v346 = vadd.f32 0.0, %v345
    %347 = vdwg.mxu0
    %v348 = vadd.f32 %v146, %v346
    %v349 = vxor.u32 %v348, 2147483648
    %v350 = vmul.f32 %v349, 1.442695
    %v351 = vpow.pop %v350
    %v352 = vadd.f32 %v351, 1.0
    %v353 = vrcp.pop %v352
    %v354 = vmul.f32 %v352, %v353
    %v355 = vsub.f32 1.0, %v354
    %v356 = vmul.f32 %v353, %v355
    %v357 = vadd.f32 %v353, %v356
    %vm358 = vweird.f32 %v352
    %vm359 = vweird.f32 %v353
    %vm360 = vmor %vm358, %vm359
    %v361 = vsel %vm360, %v353, %v357
    %v362 = vand.u32 2147483647, %v352
    %vm363 = vcmp.eq.f32.partialorder %v362, 8.507059e+37
    %v364 = vand.u32 %v352, 2147483648
    %v365 = vor.u32 1.1754944e-38, %v364
    %v366 = vsel %vm363, %v365, %v361
    %v367 = vmul.f32 1.0, %v366
    %v368 = vadd.f32 %v346, %v213
    %370 = vrot.lane.b32.xlu0 %v368, 64
    %v371 = vpop.permute.xlu0 %370
    %v373 = vmul.f32 %v367, %v371
    %375 = vrot.lane.b32.xlu0 %v373, 64
    %v376 = vpop.permute.xlu0 %375
    %v378 = vadd.f32 %v146, %v376
    %v379 = vtanh.pop %v378
    %v380 = vsub.f32 1.0, %v367
    %382 = vrot.lane.b32.xlu0 %v379, 96
    %v383 = vpop.permute.xlu0 %382
    %v385 = vmul.f32 %v380, %v383
    %v386 = vmul.f32 %v367, %v234
    %v387 = vadd.f32 %v385, %v386
    %389 = vrot.lane.b32.xlu0 %v387, 96
    %v390 = vpop.permute.xlu0 %389
    %v391 = vsel %vm166, %v390, 0
    %393 = vmatpush.msra.mxu0 0.0
    %394 = vmatpush.msra.mxu0 0.0
    %395 = vmatpush.msra.mxu0 0.0
    %396 = vmatpush.msra.mxu0 0.0
    %397 = vmatpush.msra.mxu0 0.0
    %398 = vmatpush.msra.mxu0 0.0
    %399 = vmatpush.msra.mxu0 0.0
    %400 = vmatpush.msra.mxu0 0.0
    %401 = vmatpush.msra.mxu0 0.0
    %402 = vmatpush.msra.mxu0 0.0
    %403 = vmatpush.msra.mxu0 0.0
    %404 = vmatpush.msra.mxu0 0.0
    %405 = vmatpush.msra.mxu0 %v82
    %406 = vmatpush.msra.mxu0 %v81
    %407 = vmatpush.msra.mxu0 %v80
    %408 = vmatpush.msra.mxu0 %v79
    %409 = vmatmul.f32.gmra.mxu0 %v391
    %v410 = vpop.f32.mrf.mxu0
    %v411 = vadd.f32 %v236, %v410
    %412 = vdwg.mxu0
    %414 = vrot.lane.b32.xlu0 %v327, 96
    %v415 = vpop.permute.xlu0 %414
    %v416 = vsel %vm166, %v415, 0
    %418 = vmatpush.msra.mxu0 0.0
    %419 = vmatpush.msra.mxu0 0.0
    %420 = vmatpush.msra.mxu0 0.0
    %421 = vmatpush.msra.mxu0 0.0
    %422 = vmatpush.msra.mxu0 0.0
    %423 = vmatpush.msra.mxu0 0.0
    %424 = vmatpush.msra.mxu0 0.0
    %425 = vmatpush.msra.mxu0 0.0
    %426 = vmatpush.msra.mxu0 0.0
    %427 = vmatpush.msra.mxu0 0.0
    %428 = vmatpush.msra.mxu0 0.0
    %429 = vmatpush.msra.mxu0 0.0
    %430 = vmatpush.msra.mxu0 %v86
    %431 = vmatpush.msra.mxu0 %v85
    %432 = vmatpush.msra.mxu0 %v84
    %433 = vmatpush.msra.mxu0 %v83
    %434 = vmatmul.f32.gmra.mxu0 %v416
    %v435 = vpop.f32.mrf.mxu0
    %v436 = vadd.f32 0.0, %v435
    %437 = vdwg.mxu0
    %v438 = vadd.f32 %v411, %v436
    %v439 = vxor.u32 %v438, 2147483648
    %v440 = vmul.f32 %v439, 1.442695
    %v441 = vpow.pop %v440
    %v442 = vadd.f32 %v441, 1.0
    %v443 = vrcp.pop %v442
    %v444 = vmul.f32 %v442, %v443
    %v445 = vsub.f32 1.0, %v444
    %v446 = vmul.f32 %v443, %v445
    %v447 = vadd.f32 %v443, %v446
    %vm448 = vweird.f32 %v442
    %vm449 = vweird.f32 %v443
    %vm450 = vmor %vm448, %vm449
    %v451 = vsel %vm450, %v443, %v447
    %v452 = vand.u32 2147483647, %v442
    %vm453 = vcmp.eq.f32.partialorder %v452, 8.507059e+37
    %v454 = vand.u32 %v442, 2147483648
    %v455 = vor.u32 1.1754944e-38, %v454
    %v456 = vsel %vm453, %v455, %v451
    %v457 = vmul.f32 1.0, %v456
    %v458 = vadd.f32 %v436, %v306
    %460 = vrot.lane.b32.xlu0 %v458, 64
    %v461 = vpop.permute.xlu0 %460
    %v463 = vmul.f32 %v457, %v461
    %465 = vrot.lane.b32.xlu0 %v463, 64
    %v466 = vpop.permute.xlu0 %465
    %v468 = vadd.f32 %v411, %v466
    %v469 = vtanh.pop %v468
    %v470 = vsub.f32 1.0, %v457
    %472 = vrot.lane.b32.xlu0 %v469, 96
    %v473 = vpop.permute.xlu0 %472
    %v475 = vmul.f32 %v470, %v473
    %v476 = vmul.f32 %v457, %v327
    %v477 = vadd.f32 %v475, %v476
    %478 = vmatpush.msra.mxu0 0.0
    %479 = vmatpush.msra.mxu0 0.0
    %480 = vmatpush.msra.mxu0 0.0
    %481 = vmatpush.msra.mxu0 0.0
    %482 = vmatpush.msra.mxu0 0.0
    %483 = vmatpush.msra.mxu0 0.0
    %484 = vmatpush.msra.mxu0 0.0
    %485 = vmatpush.msra.mxu0 0.0
    %486 = vmatpush.msra.mxu0 0.0
    %487 = vmatpush.msra.mxu0 0.0
    %488 = vmatpush.msra.mxu0 0.0
    %489 = vmatpush.msra.mxu0 0.0
    %490 = vmatpush.msra.mxu0 %v76
    %491 = vmatpush.msra.mxu0 %v75
    %492 = vmatpush.msra.mxu0 %v74
    %493 = vmatpush.msra.mxu0 %v73
    %494 = vmatmul.f32.gmra.mxu0 %v391
    %v495 = vpop.f32.mrf.mxu0
    %v496 = vadd.f32 0.0, %v495
    %497 = vdwg.mxu0
    %v498 = vadd.f32 %v149, %v496
    %v499 = vxor.u32 %v498, 2147483648
    %v500 = vmul.f32 %v499, 1.442695
    %v501 = vpow.pop %v500
    %v502 = vadd.f32 %v501, 1.0
    %v503 = vrcp.pop %v502
    %v504 = vmul.f32 %v502, %v503
    %v505 = vsub.f32 1.0, %v504
    %v506 = vmul.f32 %v503, %v505
    %v507 = vadd.f32 %v503, %v506
    %vm508 = vweird.f32 %v502
    %vm509 = vweird.f32 %v503
    %vm510 = vmor %vm508, %vm509
    %v511 = vsel %vm510, %v503, %v507
    %v512 = vand.u32 2147483647, %v502
    %vm513 = vcmp.eq.f32.partialorder %v512, 8.507059e+37
    %v514 = vand.u32 %v502, 2147483648
    %v515 = vor.u32 1.1754944e-38, %v514
    %v516 = vsel %vm513, %v515, %v511
    %v517 = vmul.f32 1.0, %v516
    %v518 = vadd.f32 %v496, %v213
    %520 = vrot.lane.b32.xlu0 %v518, 64
    %v521 = vpop.permute.xlu0 %520
    %v523 = vmul.f32 %v517, %v521
    %525 = vrot.lane.b32.xlu0 %v523, 64
    %v526 = vpop.permute.xlu0 %525
    %v528 = vadd.f32 %v149, %v526
    %v529 = vtanh.pop %v528
    %v530 = vsub.f32 1.0, %v517
    %532 = vrot.lane.b32.xlu0 %v529, 96
    %v533 = vpop.permute.xlu0 %532
    %v535 = vmul.f32 %v530, %v533
    %v536 = vmul.f32 %v517, %v387
    %v537 = vadd.f32 %v535, %v536
    %539 = vrot.lane.b32.xlu0 %v537, 96
    %v540 = vpop.permute.xlu0 %539
    %v541 = vsel %vm166, %v540, 0
    %543 = vmatpush.msra.mxu0 0.0
    %544 = vmatpush.msra.mxu0 0.0
    %545 = vmatpush.msra.mxu0 0.0
    %546 = vmatpush.msra.mxu0 0.0
    %547 = vmatpush.msra.mxu0 0.0
    %548 = vmatpush.msra.mxu0 0.0
    %549 = vmatpush.msra.mxu0 0.0
    %550 = vmatpush.msra.mxu0 0.0
    %551 = vmatpush.msra.mxu0 0.0
    %552 = vmatpush.msra.mxu0 0.0
    %553 = vmatpush.msra.mxu0 0.0
    %554 = vmatpush.msra.mxu0 0.0
    %555 = vmatpush.msra.mxu0 %v82
    %556 = vmatpush.msra.mxu0 %v81
    %557 = vmatpush.msra.mxu0 %v80
    %558 = vmatpush.msra.mxu0 %v79
    %559 = vmatmul.f32.gmra.mxu0 %v541
    %v560 = vpop.f32.mrf.mxu0
    %v561 = vadd.f32 %v236, %v560
    %562 = vdwg.mxu0
    %564 = vrot.lane.b32.xlu0 %v477, 96
    %v565 = vpop.permute.xlu0 %564
    %v566 = vsel %vm166, %v565, 0
    %568 = vmatpush.msra.mxu0 0.0
    %569 = vmatpush.msra.mxu0 0.0
    %570 = vmatpush.msra.mxu0 0.0
    %571 = vmatpush.msra.mxu0 0.0
    %572 = vmatpush.msra.mxu0 0.0
    %573 = vmatpush.msra.mxu0 0.0
    %574 = vmatpush.msra.mxu0 0.0
    %575 = vmatpush.msra.mxu0 0.0
    %576 = vmatpush.msra.mxu0 0.0
    %577 = vmatpush.msra.mxu0 0.0
    %578 = vmatpush.msra.mxu0 0.0
    %579 = vmatpush.msra.mxu0 0.0
    %580 = vmatpush.msra.mxu0 %v86
    %581 = vmatpush.msra.mxu0 %v85
    %582 = vmatpush.msra.mxu0 %v84
    %583 = vmatpush.msra.mxu0 %v83
    %584 = vmatmul.f32.gmra.mxu0 %v566
    %v585 = vpop.f32.mrf.mxu0
    %v586 = vadd.f32 0.0, %v585
    %587 = vdwg.mxu0
    %v588 = vadd.f32 %v561, %v586
    %v589 = vxor.u32 %v588, 2147483648
    %v590 = vmul.f32 %v589, 1.442695
    %v591 = vpow.pop %v590
    %v592 = vadd.f32 %v591, 1.0
    %v593 = vrcp.pop %v592
    %v594 = vmul.f32 %v592, %v593
    %v595 = vsub.f32 1.0, %v594
    %v596 = vmul.f32 %v593, %v595
    %v597 = vadd.f32 %v593, %v596
    %vm598 = vweird.f32 %v592
    %vm599 = vweird.f32 %v593
    %vm600 = vmor %vm598, %vm599
    %v601 = vsel %vm600, %v593, %v597
    %v602 = vand.u32 2147483647, %v592
    %vm603 = vcmp.eq.f32.partialorder %v602, 8.507059e+37
    %v604 = vand.u32 %v592, 2147483648
    %v605 = vor.u32 1.1754944e-38, %v604
    %v606 = vsel %vm603, %v605, %v601
    %v607 = vmul.f32 1.0, %v606
    %v608 = vadd.f32 %v586, %v306
    %610 = vrot.lane.b32.xlu0 %v608, 64
    %v611 = vpop.permute.xlu0 %610
    %v613 = vmul.f32 %v607, %v611
    %615 = vrot.lane.b32.xlu0 %v613, 64
    %v616 = vpop.permute.xlu0 %615
    %v618 = vadd.f32 %v561, %v616
    %v619 = vtanh.pop %v618
    %v620 = vsub.f32 1.0, %v607
    %622 = vrot.lane.b32.xlu0 %v619, 96
    %v623 = vpop.permute.xlu0 %622
    %v625 = vmul.f32 %v620, %v623
    %v626 = vmul.f32 %v607, %v477
    %v627 = vadd.f32 %v625, %v626
    %628 = vmatpush.msra.mxu0 0.0
    %629 = vmatpush.msra.mxu0 0.0
    %630 = vmatpush.msra.mxu0 0.0
    %631 = vmatpush.msra.mxu0 0.0
    %632 = vmatpush.msra.mxu0 0.0
    %633 = vmatpush.msra.mxu0 0.0
    %634 = vmatpush.msra.mxu0 0.0
    %635 = vmatpush.msra.mxu0 0.0
    %636 = vmatpush.msra.mxu0 0.0
    %637 = vmatpush.msra.mxu0 0.0
    %638 = vmatpush.msra.mxu0 0.0
    %639 = vmatpush.msra.mxu0 0.0
    %640 = vmatpush.msra.mxu0 %v76
    %641 = vmatpush.msra.mxu0 %v75
    %642 = vmatpush.msra.mxu0 %v74
    %643 = vmatpush.msra.mxu0 %v73
    %644 = vmatmul.f32.gmra.mxu0 %v541
    %v645 = vpop.f32.mrf.mxu0
    %v646 = vadd.f32 0.0, %v645
    %647 = vdwg.mxu0
    %v648 = vadd.f32 %v152, %v646
    %v649 = vxor.u32 %v648, 2147483648
    %v650 = vmul.f32 %v649, 1.442695
    %v651 = vpow.pop %v650
    %v652 = vadd.f32 %v651, 1.0
    %v653 = vrcp.pop %v652
    %v654 = vmul.f32 %v652, %v653
    %v655 = vsub.f32 1.0, %v654
    %v656 = vmul.f32 %v653, %v655
    %v657 = vadd.f32 %v653, %v656
    %vm658 = vweird.f32 %v652
    %vm659 = vweird.f32 %v653
    %vm660 = vmor %vm658, %vm659
    %v661 = vsel %vm660, %v653, %v657
    %v662 = vand.u32 2147483647, %v652
    %vm663 = vcmp.eq.f32.partialorder %v662, 8.507059e+37
    %v664 = vand.u32 %v652, 2147483648
    %v665 = vor.u32 1.1754944e-38, %v664
    %v666 = vsel %vm663, %v665, %v661
    %v667 = vmul.f32 1.0, %v666
    %v668 = vadd.f32 %v646, %v213
    %670 = vrot.lane.b32.xlu0 %v668, 64
    %v671 = vpop.permute.xlu0 %670
    %v673 = vmul.f32 %v667, %v671
    %675 = vrot.lane.b32.xlu0 %v673, 64
    %v676 = vpop.permute.xlu0 %675
    %v678 = vadd.f32 %v152, %v676
    %v679 = vtanh.pop %v678
    %v680 = vsub.f32 1.0, %v667
    %682 = vrot.lane.b32.xlu0 %v679, 96
    %v683 = vpop.permute.xlu0 %682
    %v685 = vmul.f32 %v680, %v683
    %v686 = vmul.f32 %v667, %v537
    %v687 = vadd.f32 %v685, %v686
    %689 = vrot.lane.b32.xlu0 %v687, 96
    %v690 = vpop.permute.xlu0 %689
    %v691 = vsel %vm166, %v690, 0
    %693 = vmatpush.msra.mxu0 0.0
    %694 = vmatpush.msra.mxu0 0.0
    %695 = vmatpush.msra.mxu0 0.0
    %696 = vmatpush.msra.mxu0 0.0
    %697 = vmatpush.msra.mxu0 0.0
    %698 = vmatpush.msra.mxu0 0.0
    %699 = vmatpush.msra.mxu0 0.0
    %700 = vmatpush.msra.mxu0 0.0
    %701 = vmatpush.msra.mxu0 0.0
    %702 = vmatpush.msra.mxu0 0.0
    %703 = vmatpush.msra.mxu0 0.0
    %704 = vmatpush.msra.mxu0 0.0
    %705 = vmatpush.msra.mxu0 %v82
    %706 = vmatpush.msra.mxu0 %v81
    %707 = vmatpush.msra.mxu0 %v80
    %708 = vmatpush.msra.mxu0 %v79
    %709 = vmatmul.f32.gmra.mxu0 %v691
    %v710 = vpop.f32.mrf.mxu0
    %v711 = vadd.f32 %v236, %v710
    %712 = vdwg.mxu0
    %714 = vrot.lane.b32.xlu0 %v627, 96
    %v715 = vpop.permute.xlu0 %714
    %v716 = vsel %vm166, %v715, 0
    %718 = vmatpush.msra.mxu0 0.0
    %719 = vmatpush.msra.mxu0 0.0
    %720 = vmatpush.msra.mxu0 0.0
    %721 = vmatpush.msra.mxu0 0.0
    %722 = vmatpush.msra.mxu0 0.0
    %723 = vmatpush.msra.mxu0 0.0
    %724 = vmatpush.msra.mxu0 0.0
    %725 = vmatpush.msra.mxu0 0.0
    %726 = vmatpush.msra.mxu0 0.0
    %727 = vmatpush.msra.mxu0 0.0
    %728 = vmatpush.msra.mxu0 0.0
    %729 = vmatpush.msra.mxu0 0.0
    %730 = vmatpush.msra.mxu0 %v86
    %731 = vmatpush.msra.mxu0 %v85
    %732 = vmatpush.msra.mxu0 %v84
    %733 = vmatpush.msra.mxu0 %v83
    %734 = vmatmul.f32.gmra.mxu0 %v716
    %v735 = vpop.f32.mrf.mxu0
    %v736 = vadd.f32 0.0, %v735
    %737 = vdwg.mxu0
    %v738 = vadd.f32 %v711, %v736
    %v739 = vxor.u32 %v738, 2147483648
    %v740 = vmul.f32 %v739, 1.442695
    %v741 = vpow.pop %v740
    %v742 = vadd.f32 %v741, 1.0
    %v743 = vrcp.pop %v742
    %v744 = vmul.f32 %v742, %v743
    %v745 = vsub.f32 1.0, %v744
    %v746 = vmul.f32 %v743, %v745
    %v747 = vadd.f32 %v743, %v746
    %vm748 = vweird.f32 %v742
    %vm749 = vweird.f32 %v743
    %vm750 = vmor %vm748, %vm749
    %v751 = vsel %vm750, %v743, %v747
    %v752 = vand.u32 2147483647, %v742
    %vm753 = vcmp.eq.f32.partialorder %v752, 8.507059e+37
    %v754 = vand.u32 %v742, 2147483648
    %v755 = vor.u32 1.1754944e-38, %v754
    %v756 = vsel %vm753, %v755, %v751
    %v757 = vmul.f32 1.0, %v756
    %v758 = vadd.f32 %v736, %v306
    %760 = vrot.lane.b32.xlu0 %v758, 64
    %v761 = vpop.permute.xlu0 %760
    %v763 = vmul.f32 %v757, %v761
    %765 = vrot.lane.b32.xlu0 %v763, 64
    %v766 = vpop.permute.xlu0 %765
    %v768 = vadd.f32 %v711, %v766
    %v769 = vtanh.pop %v768
    %v770 = vsub.f32 1.0, %v757
    %772 = vrot.lane.b32.xlu0 %v769, 96
    %v773 = vpop.permute.xlu0 %772
    %v775 = vmul.f32 %v770, %v773
    %v776 = vmul.f32 %v757, %v627
    %v777 = vadd.f32 %v775, %v776
    %778 = vmatpush.msra.mxu0 0.0
    %779 = vmatpush.msra.mxu0 0.0
    %780 = vmatpush.msra.mxu0 0.0
    %781 = vmatpush.msra.mxu0 0.0
    %782 = vmatpush.msra.mxu0 0.0
    %783 = vmatpush.msra.mxu0 0.0
    %784 = vmatpush.msra.mxu0 0.0
    %785 = vmatpush.msra.mxu0 0.0
    %786 = vmatpush.msra.mxu0 0.0
    %787 = vmatpush.msra.mxu0 0.0
    %788 = vmatpush.msra.mxu0 0.0
    %789 = vmatpush.msra.mxu0 0.0
    %790 = vmatpush.msra.mxu0 %v76
    %791 = vmatpush.msra.mxu0 %v75
    %792 = vmatpush.msra.mxu0 %v74
    %793 = vmatpush.msra.mxu0 %v73
    %794 = vmatmul.f32.gmra.mxu0 %v691
    %v795 = vpop.f32.mrf.mxu0
    %v796 = vadd.f32 0.0, %v795
    %797 = vdwg.mxu0
    %v798 = vadd.f32 %v155, %v796
    %v799 = vxor.u32 %v798, 2147483648
    %v800 = vmul.f32 %v799, 1.442695
    %v801 = vpow.pop %v800
    %v802 = vadd.f32 %v801, 1.0
    %v803 = vrcp.pop %v802
    %v804 = vmul.f32 %v802, %v803
    %v805 = vsub.f32 1.0, %v804
    %v806 = vmul.f32 %v803, %v805
    %v807 = vadd.f32 %v803, %v806
    %vm808 = vweird.f32 %v802
    %vm809 = vweird.f32 %v803
    %vm810 = vmor %vm808, %vm809
    %v811 = vsel %vm810, %v803, %v807
    %v812 = vand.u32 2147483647, %v802
    %vm813 = vcmp.eq.f32.partialorder %v812, 8.507059e+37
    %v814 = vand.u32 %v802, 2147483648
    %v815 = vor.u32 1.1754944e-38, %v814
    %v816 = vsel %vm813, %v815, %v811
    %v817 = vmul.f32 1.0, %v816
    %v818 = vadd.f32 %v796, %v213
    %820 = vrot.lane.b32.xlu0 %v818, 64
    %v821 = vpop.permute.xlu0 %820
    %v823 = vmul.f32 %v817, %v821
    %825 = vrot.lane.b32.xlu0 %v823, 64
    %v826 = vpop.permute.xlu0 %825
    %v828 = vadd.f32 %v155, %v826
    %v829 = vtanh.pop %v828
    %v830 = vsub.f32 1.0, %v817
    %832 = vrot.lane.b32.xlu0 %v829, 96
    %v833 = vpop.permute.xlu0 %832
    %v835 = vmul.f32 %v830, %v833
    %v836 = vmul.f32 %v817, %v687
    %v837 = vadd.f32 %v835, %v836
    %839 = vrot.lane.b32.xlu0 %v837, 96
    %v840 = vpop.permute.xlu0 %839
    %v841 = vsel %vm166, %v840, 0
    %843 = vmatpush.msra.mxu0 0.0
    %844 = vmatpush.msra.mxu0 0.0
    %845 = vmatpush.msra.mxu0 0.0
    %846 = vmatpush.msra.mxu0 0.0
    %847 = vmatpush.msra.mxu0 0.0
    %848 = vmatpush.msra.mxu0 0.0
    %849 = vmatpush.msra.mxu0 0.0
    %850 = vmatpush.msra.mxu0 0.0
    %851 = vmatpush.msra.mxu0 0.0
    %852 = vmatpush.msra.mxu0 0.0
    %853 = vmatpush.msra.mxu0 0.0
    %854 = vmatpush.msra.mxu0 0.0
    %855 = vmatpush.msra.mxu0 %v82
    %856 = vmatpush.msra.mxu0 %v81
    %857 = vmatpush.msra.mxu0 %v80
    %858 = vmatpush.msra.mxu0 %v79
    %859 = vmatmul.f32.gmra.mxu0 %v841
    %v860 = vpop.f32.mrf.mxu0
    %v861 = vadd.f32 %v236, %v860
    %862 = vdwg.mxu0
    %864 = vrot.lane.b32.xlu0 %v777, 96
    %v865 = vpop.permute.xlu0 %864
    %v866 = vsel %vm166, %v865, 0
    %868 = vmatpush.msra.mxu0 0.0
    %869 = vmatpush.msra.mxu0 0.0
    %870 = vmatpush.msra.mxu0 0.0
    %871 = vmatpush.msra.mxu0 0.0
    %872 = vmatpush.msra.mxu0 0.0
    %873 = vmatpush.msra.mxu0 0.0
    %874 = vmatpush.msra.mxu0 0.0
    %875 = vmatpush.msra.mxu0 0.0
    %876 = vmatpush.msra.mxu0 0.0
    %877 = vmatpush.msra.mxu0 0.0
    %878 = vmatpush.msra.mxu0 0.0
    %879 = vmatpush.msra.mxu0 0.0
    %880 = vmatpush.msra.mxu0 %v86
    %881 = vmatpush.msra.mxu0 %v85
    %882 = vmatpush.msra.mxu0 %v84
    %883 = vmatpush.msra.mxu0 %v83
    %884 = vmatmul.f32.gmra.mxu0 %v866
    %v885 = vpop.f32.mrf.mxu0
    %v886 = vadd.f32 0.0, %v885
    %887 = vdwg.mxu0
    %v888 = vadd.f32 %v861, %v886
    %v889 = vxor.u32 %v888, 2147483648
    %v890 = vmul.f32 %v889, 1.442695
    %v891 = vpow.pop %v890
    %v892 = vadd.f32 %v891, 1.0
    %v893 = vrcp.pop %v892
    %v894 = vmul.f32 %v892, %v893
    %v895 = vsub.f32 1.0, %v894
    %v896 = vmul.f32 %v893, %v895
    %v897 = vadd.f32 %v893, %v896
    %vm898 = vweird.f32 %v892
    %vm899 = vweird.f32 %v893
    %vm900 = vmor %vm898, %vm899
    %v901 = vsel %vm900, %v893, %v897
    %v902 = vand.u32 2147483647, %v892
    %vm903 = vcmp.eq.f32.partialorder %v902, 8.507059e+37
    %v904 = vand.u32 %v892, 2147483648
    %v905 = vor.u32 1.1754944e-38, %v904
    %v906 = vsel %vm903, %v905, %v901
    %v907 = vmul.f32 1.0, %v906
    %v908 = vadd.f32 %v886, %v306
    %910 = vrot.lane.b32.xlu0 %v908, 64
    %v911 = vpop.permute.xlu0 %910
    %v913 = vmul.f32 %v907, %v911
    %915 = vrot.lane.b32.xlu0 %v913, 64
    %v916 = vpop.permute.xlu0 %915
    %v918 = vadd.f32 %v861, %v916
    %v919 = vtanh.pop %v918
    %v920 = vsub.f32 1.0, %v907
    %922 = vrot.lane.b32.xlu0 %v919, 96
    %v923 = vpop.permute.xlu0 %922
    %v925 = vmul.f32 %v920, %v923
    %v926 = vmul.f32 %v907, %v777
    %v927 = vadd.f32 %v925, %v926
    %928 = vmatpush.msra.mxu0 0.0
    %929 = vmatpush.msra.mxu0 0.0
    %930 = vmatpush.msra.mxu0 0.0
    %931 = vmatpush.msra.mxu0 0.0
    %932 = vmatpush.msra.mxu0 0.0
    %933 = vmatpush.msra.mxu0 0.0
    %934 = vmatpush.msra.mxu0 0.0
    %935 = vmatpush.msra.mxu0 0.0
    %936 = vmatpush.msra.mxu0 0.0
    %937 = vmatpush.msra.mxu0 0.0
    %938 = vmatpush.msra.mxu0 0.0
    %939 = vmatpush.msra.mxu0 0.0
    %940 = vmatpush.msra.mxu0 %v76
    %941 = vmatpush.msra.mxu0 %v75
    %942 = vmatpush.msra.mxu0 %v74
    %943 = vmatpush.msra.mxu0 %v73
    %944 = vmatmul.f32.gmra.mxu0 %v841
    %v945 = vpop.f32.mrf.mxu0
    %v946 = vadd.f32 0.0, %v945
    %947 = vdwg.mxu0
    %v948 = vadd.f32 %v158, %v946
    %v949 = vxor.u32 %v948, 2147483648
    %v950 = vmul.f32 %v949, 1.442695
    %v951 = vpow.pop %v950
    %v952 = vadd.f32 %v951, 1.0
    %v953 = vrcp.pop %v952
    %v954 = vmul.f32 %v952, %v953
    %v955 = vsub.f32 1.0, %v954
    %v956 = vmul.f32 %v953, %v955
    %v957 = vadd.f32 %v953, %v956
    %vm958 = vweird.f32 %v952
    %vm959 = vweird.f32 %v953
    %vm960 = vmor %vm958, %vm959
    %v961 = vsel %vm960, %v953, %v957
    %v962 = vand.u32 2147483647, %v952
    %vm963 = vcmp.eq.f32.partialorder %v962, 8.507059e+37
    %v964 = vand.u32 %v952, 2147483648
    %v965 = vor.u32 1.1754944e-38, %v964
    %v966 = vsel %vm963, %v965, %v961
    %v967 = vmul.f32 1.0, %v966
    %v968 = vadd.f32 %v946, %v213
    %970 = vrot.lane.b32.xlu0 %v968, 64
    %v971 = vpop.permute.xlu0 %970
    %v973 = vmul.f32 %v967, %v971
    %975 = vrot.lane.b32.xlu0 %v973, 64
    %v976 = vpop.permute.xlu0 %975
    %v978 = vadd.f32 %v158, %v976
    %v979 = vtanh.pop %v978
    %v980 = vsub.f32 1.0, %v967
    %982 = vrot.lane.b32.xlu0 %v979, 96
    %v983 = vpop.permute.xlu0 %982
    %v985 = vmul.f32 %v980, %v983
    %v986 = vmul.f32 %v967, %v837
    %v987 = vadd.f32 %v985, %v986
    %989 = vrot.lane.b32.xlu0 %v987, 96
    %v990 = vpop.permute.xlu0 %989
    %v991 = vsel %vm166, %v990, 0
    %993 = vmatpush.msra.mxu0 0.0
    %994 = vmatpush.msra.mxu0 0.0
    %995 = vmatpush.msra.mxu0 0.0
    %996 = vmatpush.msra.mxu0 0.0
    %997 = vmatpush.msra.mxu0 0.0
    %998 = vmatpush.msra.mxu0 0.0
    %999 = vmatpush.msra.mxu0 0.0
    %1000 = vmatpush.msra.mxu0 0.0
    %1001 = vmatpush.msra.mxu0 0.0
    %1002 = vmatpush.msra.mxu0 0.0
    %1003 = vmatpush.msra.mxu0 0.0
    %1004 = vmatpush.msra.mxu0 0.0
    %1005 = vmatpush.msra.mxu0 %v82
    %1006 = vmatpush.msra.mxu0 %v81
    %1007 = vmatpush.msra.mxu0 %v80
    %1008 = vmatpush.msra.mxu0 %v79
    %1009 = vmatmul.f32.gmra.mxu0 %v991
    %v1010 = vpop.f32.mrf.mxu0
    %v1011 = vadd.f32 %v236, %v1010
    %1012 = vdwg.mxu0
    %1014 = vrot.lane.b32.xlu0 %v927, 96
    %v1015 = vpop.permute.xlu0 %1014
    %v1016 = vsel %vm166, %v1015, 0
    %1018 = vmatpush.msra.mxu0 0.0
    %1019 = vmatpush.msra.mxu0 0.0
    %1020 = vmatpush.msra.mxu0 0.0
    %1021 = vmatpush.msra.mxu0 0.0
    %1022 = vmatpush.msra.mxu0 0.0
    %1023 = vmatpush.msra.mxu0 0.0
    %1024 = vmatpush.msra.mxu0 0.0
    %1025 = vmatpush.msra.mxu0 0.0
    %1026 = vmatpush.msra.mxu0 0.0
    %1027 = vmatpush.msra.mxu0 0.0
    %1028 = vmatpush.msra.mxu0 0.0
    %1029 = vmatpush.msra.mxu0 0.0
    %1030 = vmatpush.msra.mxu0 %v86
    %1031 = vmatpush.msra.mxu0 %v85
    %1032 = vmatpush.msra.mxu0 %v84
    %1033 = vmatpush.msra.mxu0 %v83
    %1034 = vmatmul.f32.gmra.mxu0 %v1016
    %v1035 = vpop.f32.mrf.mxu0
    %v1036 = vadd.f32 0.0, %v1035
    %1037 = vdwg.mxu0
    %v1038 = vadd.f32 %v1011, %v1036
    %v1039 = vxor.u32 %v1038, 2147483648
    %v1040 = vmul.f32 %v1039, 1.442695
    %v1041 = vpow.pop %v1040
    %v1042 = vadd.f32 %v1041, 1.0
    %v1043 = vrcp.pop %v1042
    %v1044 = vmul.f32 %v1042, %v1043
    %v1045 = vsub.f32 1.0, %v1044
    %v1046 = vmul.f32 %v1043, %v1045
    %v1047 = vadd.f32 %v1043, %v1046
    %vm1048 = vweird.f32 %v1042
    %vm1049 = vweird.f32 %v1043
    %vm1050 = vmor %vm1048, %vm1049
    %v1051 = vsel %vm1050, %v1043, %v1047
    %v1052 = vand.u32 2147483647, %v1042
    %vm1053 = vcmp.eq.f32.partialorder %v1052, 8.507059e+37
    %v1054 = vand.u32 %v1042, 2147483648
    %v1055 = vor.u32 1.1754944e-38, %v1054
    %v1056 = vsel %vm1053, %v1055, %v1051
    %v1057 = vmul.f32 1.0, %v1056
    %v1058 = vadd.f32 %v1036, %v306
    %1060 = vrot.lane.b32.xlu0 %v1058, 64
    %v1061 = vpop.permute.xlu0 %1060
    %v1063 = vmul.f32 %v1057, %v1061
    %1065 = vrot.lane.b32.xlu0 %v1063, 64
    %v1066 = vpop.permute.xlu0 %1065
    %v1068 = vadd.f32 %v1011, %v1066
    %v1069 = vtanh.pop %v1068
    %v1070 = vsub.f32 1.0, %v1057
    %1072 = vrot.lane.b32.xlu0 %v1069, 96
    %v1073 = vpop.permute.xlu0 %1072
    %v1075 = vmul.f32 %v1070, %v1073
    %v1076 = vmul.f32 %v1057, %v927
    %v1077 = vadd.f32 %v1075, %v1076
    %1078 = vmatpush.msra.mxu0 0.0
    %1079 = vmatpush.msra.mxu0 0.0
    %1080 = vmatpush.msra.mxu0 0.0
    %1081 = vmatpush.msra.mxu0 0.0
    %1082 = vmatpush.msra.mxu0 0.0
    %1083 = vmatpush.msra.mxu0 0.0
    %1084 = vmatpush.msra.mxu0 0.0
    %1085 = vmatpush.msra.mxu0 0.0
    %1086 = vmatpush.msra.mxu0 0.0
    %1087 = vmatpush.msra.mxu0 0.0
    %1088 = vmatpush.msra.mxu0 0.0
    %1089 = vmatpush.msra.mxu0 0.0
    %1090 = vmatpush.msra.mxu0 %v76
    %1091 = vmatpush.msra.mxu0 %v75
    %1092 = vmatpush.msra.mxu0 %v74
    %1093 = vmatpush.msra.mxu0 %v73
    %1094 = vmatmul.f32.gmra.mxu0 %v991
    %v1095 = vpop.f32.mrf.mxu0
    %v1096 = vadd.f32 0.0, %v1095
    %1097 = vdwg.mxu0
    %v1098 = vadd.f32 %v161, %v1096
    %v1099 = vxor.u32 %v1098, 2147483648
    %v1100 = vmul.f32 %v1099, 1.442695
    %v1101 = vpow.pop %v1100
    %v1102 = vadd.f32 %v1101, 1.0
    %v1103 = vrcp.pop %v1102
    %v1104 = vmul.f32 %v1102, %v1103
    %v1105 = vsub.f32 1.0, %v1104
    %v1106 = vmul.f32 %v1103, %v1105
    %v1107 = vadd.f32 %v1103, %v1106
    %vm1108 = vweird.f32 %v1102
    %vm1109 = vweird.f32 %v1103
    %vm1110 = vmor %vm1108, %vm1109
    %v1111 = vsel %vm1110, %v1103, %v1107
    %v1112 = vand.u32 2147483647, %v1102
    %vm1113 = vcmp.eq.f32.partialorder %v1112, 8.507059e+37
    %v1114 = vand.u32 %v1102, 2147483648
    %v1115 = vor.u32 1.1754944e-38, %v1114
    %v1116 = vsel %vm1113, %v1115, %v1111
    %v1117 = vmul.f32 1.0, %v1116
    %v1118 = vadd.f32 %v1096, %v213
    %1120 = vrot.lane.b32.xlu0 %v1118, 64
    %v1121 = vpop.permute.xlu0 %1120
    %v1123 = vmul.f32 %v1117, %v1121
    %1125 = vrot.lane.b32.xlu0 %v1123, 64
    %v1126 = vpop.permute.xlu0 %1125
    %v1128 = vadd.f32 %v161, %v1126
    %v1129 = vtanh.pop %v1128
    %v1130 = vsub.f32 1.0, %v1117
    %1132 = vrot.lane.b32.xlu0 %v1129, 96
    %v1133 = vpop.permute.xlu0 %1132
    %v1135 = vmul.f32 %v1130, %v1133
    %v1136 = vmul.f32 %v1117, %v987
    %v1137 = vadd.f32 %v1135, %v1136
    %1139 = vrot.lane.b32.xlu0 %v1137, 96
    %v1140 = vpop.permute.xlu0 %1139
    %v1141 = vsel %vm166, %v1140, 0
    %1143 = vmatpush.msra.mxu0 0.0
    %1144 = vmatpush.msra.mxu0 0.0
    %1145 = vmatpush.msra.mxu0 0.0
    %1146 = vmatpush.msra.mxu0 0.0
    %1147 = vmatpush.msra.mxu0 0.0
    %1148 = vmatpush.msra.mxu0 0.0
    %1149 = vmatpush.msra.mxu0 0.0
    %1150 = vmatpush.msra.mxu0 0.0
    %1151 = vmatpush.msra.mxu0 0.0
    %1152 = vmatpush.msra.mxu0 0.0
    %1153 = vmatpush.msra.mxu0 0.0
    %1154 = vmatpush.msra.mxu0 0.0
    %1155 = vmatpush.msra.mxu0 %v82
    %1156 = vmatpush.msra.mxu0 %v81
    %1157 = vmatpush.msra.mxu0 %v80
    %1158 = vmatpush.msra.mxu0 %v79
    %1159 = vmatmul.f32.gmra.mxu0 %v1141
    %v1160 = vpop.f32.mrf.mxu0
    %v1161 = vadd.f32 %v236, %v1160
    %1162 = vdwg.mxu0
    %1164 = vrot.lane.b32.xlu0 %v1077, 96
    %v1165 = vpop.permute.xlu0 %1164
    %v1166 = vsel %vm166, %v1165, 0
    %1168 = vmatpush.msra.mxu0 0.0
    %1169 = vmatpush.msra.mxu0 0.0
    %1170 = vmatpush.msra.mxu0 0.0
    %1171 = vmatpush.msra.mxu0 0.0
    %1172 = vmatpush.msra.mxu0 0.0
    %1173 = vmatpush.msra.mxu0 0.0
    %1174 = vmatpush.msra.mxu0 0.0
    %1175 = vmatpush.msra.mxu0 0.0
    %1176 = vmatpush.msra.mxu0 0.0
    %1177 = vmatpush.msra.mxu0 0.0
    %1178 = vmatpush.msra.mxu0 0.0
    %1179 = vmatpush.msra.mxu0 0.0
    %1180 = vmatpush.msra.mxu0 %v86
    %1181 = vmatpush.msra.mxu0 %v85
    %1182 = vmatpush.msra.mxu0 %v84
    %1183 = vmatpush.msra.mxu0 %v83
    %1184 = vmatmul.f32.gmra.mxu0 %v1166
    %v1185 = vpop.f32.mrf.mxu0
    %v1186 = vadd.f32 0.0, %v1185
    %1187 = vdwg.mxu0
    %v1188 = vadd.f32 %v1161, %v1186
    %v1189 = vxor.u32 %v1188, 2147483648
    %v1190 = vmul.f32 %v1189, 1.442695
    %v1191 = vpow.pop %v1190
    %v1192 = vadd.f32 %v1191, 1.0
    %v1193 = vrcp.pop %v1192
    %v1194 = vmul.f32 %v1192, %v1193
    %v1195 = vsub.f32 1.0, %v1194
    %v1196 = vmul.f32 %v1193, %v1195
    %v1197 = vadd.f32 %v1193, %v1196
    %vm1198 = vweird.f32 %v1192
    %vm1199 = vweird.f32 %v1193
    %vm1200 = vmor %vm1198, %vm1199
    %v1201 = vsel %vm1200, %v1193, %v1197
    %v1202 = vand.u32 2147483647, %v1192
    %vm1203 = vcmp.eq.f32.partialorder %v1202, 8.507059e+37
    %v1204 = vand.u32 %v1192, 2147483648
    %v1205 = vor.u32 1.1754944e-38, %v1204
    %v1206 = vsel %vm1203, %v1205, %v1201
    %v1207 = vmul.f32 1.0, %v1206
    %v1208 = vadd.f32 %v1186, %v306
    %1210 = vrot.lane.b32.xlu0 %v1208, 64
    %v1211 = vpop.permute.xlu0 %1210
    %v1213 = vmul.f32 %v1207, %v1211
    %1215 = vrot.lane.b32.xlu0 %v1213, 64
    %v1216 = vpop.permute.xlu0 %1215
    %v1218 = vadd.f32 %v1161, %v1216
    %v1219 = vtanh.pop %v1218
    %v1220 = vsub.f32 1.0, %v1207
    %1222 = vrot.lane.b32.xlu0 %v1219, 96
    %v1223 = vpop.permute.xlu0 %1222
    %v1225 = vmul.f32 %v1220, %v1223
    %v1226 = vmul.f32 %v1207, %v1077
    %v1227 = vadd.f32 %v1225, %v1226
    %1228 = vmatpush.msra.mxu0 0.0
    %1229 = vmatpush.msra.mxu0 0.0
    %1230 = vmatpush.msra.mxu0 0.0
    %1231 = vmatpush.msra.mxu0 0.0
    %1232 = vmatpush.msra.mxu0 0.0
    %1233 = vmatpush.msra.mxu0 0.0
    %1234 = vmatpush.msra.mxu0 0.0
    %1235 = vmatpush.msra.mxu0 0.0
    %1236 = vmatpush.msra.mxu0 0.0
    %1237 = vmatpush.msra.mxu0 0.0
    %1238 = vmatpush.msra.mxu0 0.0
    %1239 = vmatpush.msra.mxu0 0.0
    %1240 = vmatpush.msra.mxu0 %v76
    %1241 = vmatpush.msra.mxu0 %v75
    %1242 = vmatpush.msra.mxu0 %v74
    %1243 = vmatpush.msra.mxu0 %v73
    %1244 = vmatmul.f32.gmra.mxu0 %v1141
    %v1245 = vpop.f32.mrf.mxu0
    %v1246 = vadd.f32 0.0, %v1245
    %1247 = vdwg.mxu0
    %v1248 = vadd.f32 %v164, %v1246
    %v1249 = vxor.u32 %v1248, 2147483648
    %v1250 = vmul.f32 %v1249, 1.442695
    %v1251 = vpow.pop %v1250
    %v1252 = vadd.f32 %v1251, 1.0
    %v1253 = vrcp.pop %v1252
    %v1254 = vmul.f32 %v1252, %v1253
    %v1255 = vsub.f32 1.0, %v1254
    %v1256 = vmul.f32 %v1253, %v1255
    %v1257 = vadd.f32 %v1253, %v1256
    %vm1258 = vweird.f32 %v1252
    %vm1259 = vweird.f32 %v1253
    %vm1260 = vmor %vm1258, %vm1259
    %v1261 = vsel %vm1260, %v1253, %v1257
    %v1262 = vand.u32 2147483647, %v1252
    %vm1263 = vcmp.eq.f32.partialorder %v1262, 8.507059e+37
    %v1264 = vand.u32 %v1252, 2147483648
    %v1265 = vor.u32 1.1754944e-38, %v1264
    %v1266 = vsel %vm1263, %v1265, %v1261
    %v1267 = vmul.f32 1.0, %v1266
    %v1268 = vadd.f32 %v1246, %v213
    %1270 = vrot.lane.b32.xlu0 %v1268, 64
    %v1271 = vpop.permute.xlu0 %1270
    %v1273 = vmul.f32 %v1267, %v1271
    %1275 = vrot.lane.b32.xlu0 %v1273, 64
    %v1276 = vpop.permute.xlu0 %1275
    %v1278 = vadd.f32 %v164, %v1276
    %v1279 = vtanh.pop %v1278
    %v1280 = vsub.f32 1.0, %v1267
    %1282 = vrot.lane.b32.xlu0 %v1279, 96
    %v1283 = vpop.permute.xlu0 %1282
    %v1285 = vmul.f32 %v1280, %v1283
    %v1286 = vmul.f32 %v1267, %v1137
    %v1287 = vadd.f32 %v1285, %v1286
    %1289 = vrot.lane.b32.xlu0 %v1287, 96
    %v1290 = vpop.permute.xlu0 %1289
    %v1291 = vsel %vm166, %v1290, 0
    %1293 = vmatpush.msra.mxu0 0.0
    %1294 = vmatpush.msra.mxu0 0.0
    %1295 = vmatpush.msra.mxu0 0.0
    %1296 = vmatpush.msra.mxu0 0.0
    %1297 = vmatpush.msra.mxu0 0.0
    %1298 = vmatpush.msra.mxu0 0.0
    %1299 = vmatpush.msra.mxu0 0.0
    %1300 = vmatpush.msra.mxu0 0.0
    %1301 = vmatpush.msra.mxu0 0.0
    %1302 = vmatpush.msra.mxu0 0.0
    %1303 = vmatpush.msra.mxu0 0.0
    %1304 = vmatpush.msra.mxu0 0.0
    %1305 = vmatpush.msra.mxu0 %v82
    %1306 = vmatpush.msra.mxu0 %v81
    %1307 = vmatpush.msra.mxu0 %v80
    %1308 = vmatpush.msra.mxu0 %v79
    %1309 = vmatmul.f32.gmra.mxu0 %v1291
    %v1310 = vpop.f32.mrf.mxu0
    %v1311 = vadd.f32 %v236, %v1310
    %1312 = vdwg.mxu0
    %1314 = vrot.lane.b32.xlu0 %v1227, 96
    %v1315 = vpop.permute.xlu0 %1314
    %v1316 = vsel %vm166, %v1315, 0
    %1318 = vmatpush.msra.mxu0 0.0
    %1319 = vmatpush.msra.mxu0 0.0
    %1320 = vmatpush.msra.mxu0 0.0
    %1321 = vmatpush.msra.mxu0 0.0
    %1322 = vmatpush.msra.mxu0 0.0
    %1323 = vmatpush.msra.mxu0 0.0
    %1324 = vmatpush.msra.mxu0 0.0
    %1325 = vmatpush.msra.mxu0 0.0
    %1326 = vmatpush.msra.mxu0 0.0
    %1327 = vmatpush.msra.mxu0 0.0
    %1328 = vmatpush.msra.mxu0 0.0
    %1329 = vmatpush.msra.mxu0 0.0
    %1330 = vmatpush.msra.mxu0 %v86
    %1331 = vmatpush.msra.mxu0 %v85
    %1332 = vmatpush.msra.mxu0 %v84
    %1333 = vmatpush.msra.mxu0 %v83
    %1334 = vmatmul.f32.gmra.mxu0 %v1316
    %v1335 = vpop.f32.mrf.mxu0
    %v1336 = vadd.f32 0.0, %v1335
    %1337 = vdwg.mxu0
    %v1338 = vadd.f32 %v1311, %v1336
    %v1339 = vxor.u32 %v1338, 2147483648
    %v1340 = vmul.f32 %v1339, 1.442695
    %v1341 = vpow.pop %v1340
    %v1342 = vadd.f32 %v1341, 1.0
    %v1343 = vrcp.pop %v1342
    %v1344 = vmul.f32 %v1342, %v1343
    %v1345 = vsub.f32 1.0, %v1344
    %v1346 = vmul.f32 %v1343, %v1345
    %v1347 = vadd.f32 %v1343, %v1346
    %vm1348 = vweird.f32 %v1342
    %vm1349 = vweird.f32 %v1343
    %vm1350 = vmor %vm1348, %vm1349
    %v1351 = vsel %vm1350, %v1343, %v1347
    %v1352 = vand.u32 2147483647, %v1342
    %vm1353 = vcmp.eq.f32.partialorder %v1352, 8.507059e+37
    %v1354 = vand.u32 %v1342, 2147483648
    %v1355 = vor.u32 1.1754944e-38, %v1354
    %v1356 = vsel %vm1353, %v1355, %v1351
    %v1357 = vmul.f32 1.0, %v1356
    %v1358 = vadd.f32 %v1336, %v306
    %1360 = vrot.lane.b32.xlu0 %v1358, 64
    %v1361 = vpop.permute.xlu0 %1360
    %v1363 = vmul.f32 %v1357, %v1361
    %1365 = vrot.lane.b32.xlu0 %v1363, 64
    %v1366 = vpop.permute.xlu0 %1365
    %v1368 = vadd.f32 %v1311, %v1366
    %v1369 = vtanh.pop %v1368
    %v1370 = vsub.f32 1.0, %v1357
    %1372 = vrot.lane.b32.xlu0 %v1369, 96
    %v1373 = vpop.permute.xlu0 %1372
    %v1375 = vmul.f32 %v1370, %v1373
    %v1376 = vmul.f32 %v1357, %v1227
    %v1377 = vadd.f32 %v1375, %v1376
    %v1378 = vld [vmem:[#allocation5] sm:$0xff]
    %v1379 = vld [vmem:[#allocation5 + $0x8] sm:$0xff]
    %v1380 = vld [vmem:[#allocation5 + $0x10] sm:$0xff]
    %v1381 = vld [vmem:[#allocation5 + $0x18] sm:$0xff]
    %v1382 = vld [vmem:[%s10] sm:$0x1]
    %v1384 = vperm.slane %v1382, 0
    %1387 = vrot.lane.b32.xlu0 %v1377, 96
    %v1388 = vpop.permute.xlu0 %1387
    %v1389 = vsel %vm166, %v1388, 0
    %1391 = vmatpush.msra.mxu0 0.0
    %1392 = vmatpush.msra.mxu0 0.0
    %1393 = vmatpush.msra.mxu0 0.0
    %1394 = vmatpush.msra.mxu0 0.0
    %1395 = vmatpush.msra.mxu0 0.0
    %1396 = vmatpush.msra.mxu0 0.0
    %1397 = vmatpush.msra.mxu0 0.0
    %1398 = vmatpush.msra.mxu0 0.0
    %1399 = vmatpush.msra.mxu0 0.0
    %1400 = vmatpush.msra.mxu0 0.0
    %1401 = vmatpush.msra.mxu0 0.0
    %1402 = vmatpush.msra.mxu0 0.0
    %1403 = vmatpush.msra.mxu0 %v1381
    %1404 = vmatpush.msra.mxu0 %v1380
    %1405 = vmatpush.msra.mxu0 %v1379
    %1406 = vmatpush.msra.mxu0 %v1378
    %1407 = vmatmul.f32.gmra.mxu0 %v1389
    %v1408 = vpop.f32.mrf.mxu0
    %v1409 = vadd.f32 %v1384, %v1408
    %1410 = vdwg.mxu0
    %1411 = vst [vmem:[#allocation7] sm:$0xff] %v1409
    // Predicated region
    $region54: #{tpu_custom_call.1} parent=1 // pred_check
      _
    $region55: #{tpu_custom_call.1} parent=1 // pred_check_branch
      %1413 = sbr.rel (0) target = $region57
    $region56: #{tpu_custom_call.1} parent=1 // pred_region
      %1415 = vsyncadd [#allocation4], 0
      %s1417 = sshll.u32 [#allocation7], 4
      %s1418 = int_to_ptr.vmem [resolvable:$true] %s1417
      %s1419 = sshll.u32 %s11, 4
      %s1420 = int_to_ptr.hbm [resolvable:$true] %s1419
      %1422 = dma.vmem_to_hbm [thread:$0]  %s1418, 128, %s1420, [#allocation4]
    $region57: #{tpu_custom_call.1} parent=1 // pred_fallthru
      _
    // Predicated region
    $region58: #{tpu_custom_call.1} parent=1 // pred_check
      _
    $region59: #{tpu_custom_call.1} parent=1 // pred_check_branch
      %1424 = sbr.rel (0) target = $region61
    $region60: #{tpu_custom_call.1} parent=1 // pred_region
      %1426 = dma.done [#allocation4], 128
    $region61: #{tpu_custom_call.1} parent=1 // pred_fallthru
      _
    %1427 = vsyncpa [#allocation3], 1
    %1428 = vsyncpa [#allocation6], 1
    %1429 = vsyncpa [#allocation4], 1

</llo_original>
